<compile_context>
chip_gen: v7x
topology: tpu7x:2x2x1
jax: 0.10.0
libtpu: 0.0.40
codegen_flags: <defaults>
</compile_context>

<pallas_src>
import functools

import jax
import jax.numpy as jnp
from jax import lax
from jax.experimental import pallas as pl
from jax.experimental.pallas import tpu as pltpu

PAD_ID = 0
TAG_TO_ID = {'<pad>': 0, 'O': 1, 'B-LOC': 2, 'I-LOC': 3,
             'B-PER': 4, 'I-PER': 5, 'B-ORG': 6, 'I-ORG': 7}
TAGS_NUM = len(TAG_TO_ID)
TAGS_PAD = 128   # lane-dense output width; sliced back to TAGS_NUM in wrapper


# ----------------------------------------------------------------------------
# Fused kernel: grid=(2,) over direction (0=forward, 1=backward), "parallel".
# Each direction step: one big input-projection matmul, a fori_loop recurrence
# (only h @ W_hh per step), then one big tag-projection matmul.
# ----------------------------------------------------------------------------
def _bilstm_tag_kernel(x_ref, wih_ref, whh_ref, b_ref, wtag_ref, out_ref,
                       gx_sc, h_sc, *, T, Bp, Hd):
    is_fwd = pl.program_id(0) == 0

    # Hoisted input projection over all T*Bp rows (bias folded in).
    # Gate column order is (i, f, o, g).
    gx_sc[...] = (jnp.dot(x_ref[...], wih_ref[0],
                          preferred_element_type=jnp.float32) + b_ref[0])

    whh = whh_ref[0]                                        # (Hd, 4*Hd) resident

    def step(t, carry):
        h, c = carry
        t_idx = jnp.where(is_fwd, t, T - 1 - t)             # time reversal via index
        row = pl.multiple_of(t_idx * Bp, 8)
        gates = gx_sc[pl.ds(row, Bp), :] + jnp.dot(
            h, whh, preferred_element_type=jnp.float32)      # (Bp, 4*Hd)
        sig = jax.nn.sigmoid(gates[:, :3 * Hd])             # contiguous i, f, o
        g = jnp.tanh(gates[:, 3 * Hd:])
        i_g = sig[:, 0 * Hd:1 * Hd]
        f_g = sig[:, 1 * Hd:2 * Hd]
        o_g = sig[:, 2 * Hd:3 * Hd]
        c = f_g * c + i_g * g
        h = o_g * jnp.tanh(c)
        h_sc[pl.ds(row, Bp), :] = h                         # time-ordered store
        return h, c

    zeros = jnp.zeros((Bp, Hd), jnp.float32)
    lax.fori_loop(0, T, step, (zeros, zeros), unroll=(T <= 32))

    # Fused hidden2tag: this direction's half of W_tag, lane-dense output.
    out_ref[0] = jnp.dot(h_sc[...], wtag_ref[0],
                         preferred_element_type=jnp.float32)


# ----------------------------------------------------------------------------
# Weight preparation (trace-time): permute PyTorch gate order (i,f,g,o) to the
# kernel order (i,f,o,g) and transpose to (in, 4*Hd).
# ----------------------------------------------------------------------------
def _prep_gate_weight(w):
    i, f, g, o = jnp.split(jnp.asarray(w, jnp.float32), 4, axis=0)
    return jnp.concatenate([i, f, o, g], axis=0).T          # (in, 4*Hd)


def _prep_gate_bias(b_ih, b_hh):
    b = jnp.asarray(b_ih, jnp.float32) + jnp.asarray(b_hh, jnp.float32)
    i, f, g, o = jnp.split(b, 4)
    return jnp.concatenate([i, f, o, g]).reshape(1, -1)     # (1, 4*Hd)


# ----------------------------------------------------------------------------
# Full forward (matches BiLSTM_CRF.forward): embedding -> BiLSTM -> hidden2tag.
# ----------------------------------------------------------------------------
@jax.jit
def bilstm_crf_forward(params, inp):
    """inp: (B, T) int32 token ids -> logits (B, T, TAGS_NUM) float32."""
    B, T = inp.shape
    E = params['embedding'].shape[1]
    Hd = params['w_hh_f'].shape[1]

    # Pad batch to a multiple of 8 sublanes; padded rows are discarded later.
    Bp = max(8, ((B + 7) // 8) * 8)
    inp_p = jnp.pad(inp, ((0, Bp - B), (0, 0)), constant_values=PAD_ID)

    # Time-major embedding gather straight from the table (no transpose pass).
    x_tm = jnp.take(params['embedding'], inp_p.T, axis=0)   # (T, Bp, E)
    x2d = x_tm.reshape(T * Bp, E)                           # free row-major reshape

    # Stacked per-direction weights.
    wih = jnp.stack([_prep_gate_weight(params['w_ih_f']),
                     _prep_gate_weight(params['w_ih_b'])])  # (2, E, 4Hd)
    whh = jnp.stack([_prep_gate_weight(params['w_hh_f']),
                     _prep_gate_weight(params['w_hh_b'])])  # (2, Hd, 4Hd)
    b = jnp.stack([_prep_gate_bias(params['b_ih_f'], params['b_hh_f']),
                   _prep_gate_bias(params['b_ih_b'], params['b_hh_b'])])  # (2,1,4Hd)
    w_tag = jnp.asarray(params['w_tag'], jnp.float32)       # (tags, 2*Hd)
    wtag = jnp.stack([w_tag[:, :Hd].T, w_tag[:, Hd:].T])    # (2, Hd, tags)
    wtag = jnp.pad(wtag, ((0, 0), (0, 0), (0, TAGS_PAD - TAGS_NUM)))

    kernel = functools.partial(_bilstm_tag_kernel, T=T, Bp=Bp, Hd=Hd)
    parts = pl.pallas_call(
        kernel,
        out_shape=jax.ShapeDtypeStruct((2, T * Bp, TAGS_PAD), jnp.float32),
        grid=(2,),
        in_specs=[
            pl.BlockSpec((T * Bp, E), lambda d: (0, 0)),
            pl.BlockSpec((1, E, 4 * Hd), lambda d: (d, 0, 0)),
            pl.BlockSpec((1, Hd, 4 * Hd), lambda d: (d, 0, 0)),
            pl.BlockSpec((1, 1, 4 * Hd), lambda d: (d, 0, 0)),
            pl.BlockSpec((1, Hd, TAGS_PAD), lambda d: (d, 0, 0)),
        ],
        out_specs=pl.BlockSpec((1, T * Bp, TAGS_PAD), lambda d: (d, 0, 0)),
        scratch_shapes=[pltpu.VMEM((T * Bp, 4 * Hd), jnp.float32),
                        pltpu.VMEM((T * Bp, Hd), jnp.float32)],
        compiler_params=pltpu.CompilerParams(
            dimension_semantics=("parallel",)),
    )(x2d, wih, whh, b, wtag)

    # Combine direction halves, add bias, drop tag/batch padding.
    logits2d = (parts[0, :, :TAGS_NUM] + parts[1, :, :TAGS_NUM]
                + jnp.asarray(params['b_tag'], jnp.float32))
    logits = logits2d.reshape(T, Bp, TAGS_NUM)[:, :B, :].transpose(1, 0, 2)
    return logits                                           # (B, T, tags)


# ----------------------------------------------------------------------------
# Pure-JAX reference (mirrors torch.nn.LSTM / Linear semantics) for checking.
# ----------------------------------------------------------------------------
def _lstm_ref(x_tm, w_ih, w_hh, b_ih, b_hh):
    Hd = w_hh.shape[1]
    B = x_tm.shape[1]

    def step(carry, x_t):
        h, c = carry
        gates = x_t @ w_ih.T + h @ w_hh.T + b_ih + b_hh
        i = jax.nn.sigmoid(gates[:, :Hd])
        f = jax.nn.sigmoid(gates[:, Hd:2 * Hd])
        g = jnp.tanh(gates[:, 2 * Hd:3 * Hd])
        o = jax.nn.sigmoid(gates[:, 3 * Hd:])
        c = f * c + i * g
        h = o * jnp.tanh(c)
        return (h, c), h

    init = (jnp.zeros((B, Hd), jnp.float32), jnp.zeros((B, Hd), jnp.float32))
    _, hs = lax.scan(step, init, x_tm)
    return hs                                               # (T, B, Hd)


def forward_reference(params, inp):
    embeds = params['embedding'][inp]                       # (B, T, E)
    x_tm = jnp.transpose(embeds, (1, 0, 2))
    h_f = _lstm_ref(x_tm, params['w_ih_f'], params['w_hh_f'],
                    params['b_ih_f'], params['b_hh_f'])
    h_b = _lstm_ref(x_tm[::-1], params['w_ih_b'], params['w_hh_b'],
                    params['b_ih_b'], params['b_hh_b'])[::-1]
    h = jnp.concatenate([h_f, h_b], axis=-1)                # (T, B, 2Hd)
    logits = h @ params['w_tag'].T + params['b_tag']
    return jnp.transpose(logits, (1, 0, 2))                 # (B, T, tags)


def init_params(key, vocab_size, embedding_dim, hidden_size):
    hd = hidden_size // 2
    ks = jax.random.split(key, 11)

    def u(k, shape, bound):
        return jax.random.uniform(k, shape, jnp.float32, -bound, bound)

    emb = jax.random.normal(ks[0], (vocab_size, embedding_dim), jnp.float32)
    emb = emb.at[PAD_ID].set(0.0)   # torch.nn.Embedding padding_idx=0 -> zero row
    kb = 1.0 / (hd ** 0.5)
    kt = 1.0 / (hidden_size ** 0.5)
    return {
        'embedding': emb,
        # forward-direction LSTM params (PyTorch shapes: W_ih (4H, E), W_hh (4H, H))
        'w_ih_f': u(ks[1], (4 * hd, embedding_dim), kb),
        'w_hh_f': u(ks[2], (4 * hd, hd), kb),
        'b_ih_f': u(ks[3], (4 * hd,), kb),
        'b_hh_f': u(ks[4], (4 * hd,), kb),
        # backward-direction LSTM params
        'w_ih_b': u(ks[5], (4 * hd, embedding_dim), kb),
        'w_hh_b': u(ks[6], (4 * hd, hd), kb),
        'b_ih_b': u(ks[7], (4 * hd,), kb),
        'b_hh_b': u(ks[8], (4 * hd,), kb),
        # hidden2tag Linear: weight (tags, hidden), bias (tags,)
        'w_tag': u(ks[9], (TAGS_NUM, hidden_size), kt),
        'b_tag': u(ks[10], (TAGS_NUM,), kt),
    }


# TODO(synk): CRF neg-log-likelihood / Viterbi decode are separate methods
# (not part of forward()) and are not implemented here.

if __name__ == "__main__":
    vocab_size, embedding_dim, hidden_size = 50, 16, 32
    B, T = 2, 8

    key = jax.random.PRNGKey(0)
    pkey, ikey = jax.random.split(key)
    params = init_params(pkey, vocab_size, embedding_dim, hidden_size)
    inp = jax.random.randint(ikey, (B, T), 1, vocab_size, dtype=jnp.int32)

    logits = jax.block_until_ready(bilstm_crf_forward(params, inp))
    assert logits.shape == (B, T, TAGS_NUM)
    assert logits.dtype == jnp.float32

    ref = jax.block_until_ready(forward_reference(params, inp))
    assert jnp.allclose(logits, ref, atol=1e-2, rtol=1e-2), (
        "mismatch vs reference: max abs err "
        f"{float(jnp.max(jnp.abs(logits - ref)))}")

    print("KERNEL_OK")
</pallas_src>

<mosaic_0001>
module attributes {stable_mosaic.version = 11 : i64} {
  func.func @_bilstm_tag_kernel(%arg0: i32, %arg1: memref<64x16xf32, #tpu.memory_space<vmem>>, %arg2: memref<1x16x64xf32, #tpu.memory_space<vmem>>, %arg3: memref<1x16x64xf32, #tpu.memory_space<vmem>>, %arg4: memref<1x1x64xf32, #tpu.memory_space<vmem>>, %arg5: memref<1x16x128xf32, #tpu.memory_space<vmem>>, %arg6: memref<1x64x128xf32, #tpu.memory_space<vmem>>, %arg7: memref<64x64xf32, #tpu.memory_space<vmem>>, %arg8: memref<64x16xf32, #tpu.memory_space<vmem>>) attributes {dimension_semantics = [#tpu.dimension_semantics<parallel>], iteration_bounds = array<i64: 2>, scalar_prefetch = 0 : i64, scratch_operands = 2 : i64, tpu.core_type = #tpu.core_type<tc>, window_params = [{pipeline_mode = #tpu.pipeline_mode<synchronous>, transform_indices = @transform_0, window_bounds = array<i64: 64, 16>}, {transform_indices = @transform_1, window_bounds = array<i64: 1, 16, 64>}, {transform_indices = @transform_2, window_bounds = array<i64: 1, 16, 64>}, {transform_indices = @transform_3, window_bounds = array<i64: 1, 1, 64>}, {transform_indices = @transform_4, window_bounds = array<i64: 1, 16, 128>}, {transform_indices = @transform_5, window_bounds = array<i64: 1, 64, 128>}]} {
    %c0_i32 = arith.constant 0 : i32
    %0 = arith.cmpi eq, %arg0, %c0_i32 : i32
    %c0 = arith.constant 0 : index
    %c0_0 = arith.constant 0 : index
    %1 = vector.load %arg1[%c0, %c0_0] : memref<64x16xf32, #tpu.memory_space<vmem>>, vector<64x16xf32>
    %c0_1 = arith.constant 0 : index
    %c0_2 = arith.constant 0 : index
    %c0_3 = arith.constant 0 : index
    %2 = vector.load %arg2[%c0_1, %c0_2, %c0_3] : memref<1x16x64xf32, #tpu.memory_space<vmem>>, vector<1x16x64xf32>
    %3 = vector.shape_cast %2 : vector<1x16x64xf32> to vector<16x64xf32>
    %cst = arith.constant dense<0.000000e+00> : vector<64x64xf32>
    %4 = tpu.matmul %1, %3, %cst {dimension_numbers = #tpu.dot_dimension_numbers<[1], [0], [0], [1], [0, 0, 1, 1], [], []>} : vector<64x16xf32>, vector<16x64xf32>, vector<64x64xf32> -> vector<64x64xf32>
    %c0_4 = arith.constant 0 : index
    %c0_5 = arith.constant 0 : index
    %c0_6 = arith.constant 0 : index
    %5 = vector.load %arg4[%c0_4, %c0_5, %c0_6] : memref<1x1x64xf32, #tpu.memory_space<vmem>>, vector<1x1x64xf32>
    %6 = vector.shape_cast %5 : vector<1x1x64xf32> to vector<1x64xf32>
    %7 = vector.broadcast %6 : vector<1x64xf32> to vector<64x64xf32>
    %8 = arith.addf %4, %7 : vector<64x64xf32>
    %c0_7 = arith.constant 0 : index
    %c0_8 = arith.constant 0 : index
    %9 = vector.load %arg7[%c0_7, %c0_8] : memref<64x64xf32, #tpu.memory_space<vmem>>, vector<64x64xf32>
    tpu.vector_store %arg7[%c0_7, %c0_8], %8 {strides = array<i32>} : memref<64x64xf32, #tpu.memory_space<vmem>>, vector<64x64xf32>,
    %c0_9 = arith.constant 0 : index
    %c0_10 = arith.constant 0 : index
    %c0_11 = arith.constant 0 : index
    %10 = vector.load %arg3[%c0_9, %c0_10, %c0_11] : memref<1x16x64xf32, #tpu.memory_space<vmem>>, vector<1x16x64xf32>
    %11 = vector.shape_cast %10 : vector<1x16x64xf32> to vector<16x64xf32>
    %cst_12 = arith.constant 0.000000e+00 : f32
    %12 = vector.broadcast %cst_12 : f32 to vector<8x16xf32>
    %c0_i32_13 = arith.constant 0 : i32
    %c7_i32 = arith.constant 7 : i32
    %13 = arith.subi %c7_i32, %c0_i32_13 : i32
    %14 = arith.select %0, %c0_i32_13, %13 : i32
    %c8_i32 = arith.constant 8 : i32
    %15 = arith.muli %14, %c8_i32 : i32
    %16 = tpu.assume_multiple %15, 8 : i32
    %17 = arith.index_cast %16 : i32 to index
    %c0_14 = arith.constant 0 : index
    %18 = vector.load %arg7[%17, %c0_14] : memref<64x64xf32, #tpu.memory_space<vmem>>, vector<8x64xf32>
    %cst_15 = arith.constant dense<0.000000e+00> : vector<8x64xf32>
    %19 = tpu.matmul %12, %11, %cst_15 {dimension_numbers = #tpu.dot_dimension_numbers<[1], [0], [0], [1], [0, 0, 1, 1], [], []>} : vector<8x16xf32>, vector<16x64xf32>, vector<8x64xf32> -> vector<8x64xf32>
    %20 = arith.addf %18, %19 : vector<8x64xf32>
    %21 = vector.extract_strided_slice %20 {offsets = [0, 0], sizes = [8, 48], strides = [1, 1]} : vector<8x64xf32> to vector<8x48xf32>
    %22 = arith.negf %21 : vector<8x48xf32>
    %23 = math.exp %22 : vector<8x48xf32>
    %cst_16 = arith.constant 1.000000e+00 : f32
    %24 = vector.broadcast %cst_16 : f32 to vector<8x48xf32>
    %25 = arith.addf %24, %23 : vector<8x48xf32>
    %26 = arith.divf %24, %25 : vector<8x48xf32>
    %27 = vector.extract_strided_slice %20 {offsets = [0, 48], sizes = [8, 16], strides = [1, 1]} : vector<8x64xf32> to vector<8x16xf32>
    %28 = math.tanh %27 : vector<8x16xf32>
    %29 = vector.extract_strided_slice %26 {offsets = [0, 0], sizes = [8, 16], strides = [1, 1]} : vector<8x48xf32> to vector<8x16xf32>
    %30 = vector.extract_strided_slice %26 {offsets = [0, 16], sizes = [8, 16], strides = [1, 1]} : vector<8x48xf32> to vector<8x16xf32>
    %31 = vector.extract_strided_slice %26 {offsets = [0, 32], sizes = [8, 16], strides = [1, 1]} : vector<8x48xf32> to vector<8x16xf32>
    %32 = arith.mulf %30, %12 : vector<8x16xf32>
    %33 = arith.mulf %29, %28 : vector<8x16xf32>
    %34 = arith.addf %32, %33 : vector<8x16xf32>
    %35 = math.tanh %34 : vector<8x16xf32>
    %36 = arith.mulf %31, %35 : vector<8x16xf32>
    %37 = arith.index_cast %16 : i32 to index
    %c0_17 = arith.constant 0 : index
    %38 = vector.load %arg8[%37, %c0_17] : memref<64x16xf32, #tpu.memory_space<vmem>>, vector<8x16xf32>
    tpu.vector_store %arg8[%37, %c0_17], %36 {strides = array<i32>} : memref<64x16xf32, #tpu.memory_space<vmem>>, vector<8x16xf32>,
    %c1_i32 = arith.constant 1 : i32
    %c7_i32_18 = arith.constant 7 : i32
    %39 = arith.subi %c7_i32_18, %c1_i32 : i32
    %40 = arith.select %0, %c1_i32, %39 : i32
    %c8_i32_19 = arith.constant 8 : i32
    %41 = arith.muli %40, %c8_i32_19 : i32
    %42 = tpu.assume_multiple %41, 8 : i32
    %43 = arith.index_cast %42 : i32 to index
    %c0_20 = arith.constant 0 : index
    %44 = vector.load %arg7[%43, %c0_20] : memref<64x64xf32, #tpu.memory_space<vmem>>, vector<8x64xf32>
    %cst_21 = arith.constant dense<0.000000e+00> : vector<8x64xf32>
    %45 = tpu.matmul %36, %11, %cst_21 {dimension_numbers = #tpu.dot_dimension_numbers<[1], [0], [0], [1], [0, 0, 1, 1], [], []>} : vector<8x16xf32>, vector<16x64xf32>, vector<8x64xf32> -> vector<8x64xf32>
    %46 = arith.addf %44, %45 : vector<8x64xf32>
    %47 = vector.extract_strided_slice %46 {offsets = [0, 0], sizes = [8, 48], strides = [1, 1]} : vector<8x64xf32> to vector<8x48xf32>
    %48 = arith.negf %47 : vector<8x48xf32>
    %49 = math.exp %48 : vector<8x48xf32>
    %cst_22 = arith.constant 1.000000e+00 : f32
    %50 = vector.broadcast %cst_22 : f32 to vector<8x48xf32>
    %51 = arith.addf %50, %49 : vector<8x48xf32>
    %52 = arith.divf %50, %51 : vector<8x48xf32>
    %53 = vector.extract_strided_slice %46 {offsets = [0, 48], sizes = [8, 16], strides = [1, 1]} : vector<8x64xf32> to vector<8x16xf32>
    %54 = math.tanh %53 : vector<8x16xf32>
    %55 = vector.extract_strided_slice %52 {offsets = [0, 0], sizes = [8, 16], strides = [1, 1]} : vector<8x48xf32> to vector<8x16xf32>
    %56 = vector.extract_strided_slice %52 {offsets = [0, 16], sizes = [8, 16], strides = [1, 1]} : vector<8x48xf32> to vector<8x16xf32>
    %57 = vector.extract_strided_slice %52 {offsets = [0, 32], sizes = [8, 16], strides = [1, 1]} : vector<8x48xf32> to vector<8x16xf32>
    %58 = arith.mulf %56, %34 : vector<8x16xf32>
    %59 = arith.mulf %55, %54 : vector<8x16xf32>
    %60 = arith.addf %58, %59 : vector<8x16xf32>
    %61 = math.tanh %60 : vector<8x16xf32>
    %62 = arith.mulf %57, %61 : vector<8x16xf32>
    %63 = arith.index_cast %42 : i32 to index
    %c0_23 = arith.constant 0 : index
    %64 = vector.load %arg8[%63, %c0_23] : memref<64x16xf32, #tpu.memory_space<vmem>>, vector<8x16xf32>
    tpu.vector_store %arg8[%63, %c0_23], %62 {strides = array<i32>} : memref<64x16xf32, #tpu.memory_space<vmem>>, vector<8x16xf32>,
    %c2_i32 = arith.constant 2 : i32
    %c7_i32_24 = arith.constant 7 : i32
    %65 = arith.subi %c7_i32_24, %c2_i32 : i32
    %66 = arith.select %0, %c2_i32, %65 : i32
    %c8_i32_25 = arith.constant 8 : i32
    %67 = arith.muli %66, %c8_i32_25 : i32
    %68 = tpu.assume_multiple %67, 8 : i32
    %69 = arith.index_cast %68 : i32 to index
    %c0_26 = arith.constant 0 : index
    %70 = vector.load %arg7[%69, %c0_26] : memref<64x64xf32, #tpu.memory_space<vmem>>, vector<8x64xf32>
    %cst_27 = arith.constant dense<0.000000e+00> : vector<8x64xf32>
    %71 = tpu.matmul %62, %11, %cst_27 {dimension_numbers = #tpu.dot_dimension_numbers<[1], [0], [0], [1], [0, 0, 1, 1], [], []>} : vector<8x16xf32>, vector<16x64xf32>, vector<8x64xf32> -> vector<8x64xf32>
    %72 = arith.addf %70, %71 : vector<8x64xf32>
    %73 = vector.extract_strided_slice %72 {offsets = [0, 0], sizes = [8, 48], strides = [1, 1]} : vector<8x64xf32> to vector<8x48xf32>
    %74 = arith.negf %73 : vector<8x48xf32>
    %75 = math.exp %74 : vector<8x48xf32>
    %cst_28 = arith.constant 1.000000e+00 : f32
    %76 = vector.broadcast %cst_28 : f32 to vector<8x48xf32>
    %77 = arith.addf %76, %75 : vector<8x48xf32>
    %78 = arith.divf %76, %77 : vector<8x48xf32>
    %79 = vector.extract_strided_slice %72 {offsets = [0, 48], sizes = [8, 16], strides = [1, 1]} : vector<8x64xf32> to vector<8x16xf32>
    %80 = math.tanh %79 : vector<8x16xf32>
    %81 = vector.extract_strided_slice %78 {offsets = [0, 0], sizes = [8, 16], strides = [1, 1]} : vector<8x48xf32> to vector<8x16xf32>
    %82 = vector.extract_strided_slice %78 {offsets = [0, 16], sizes = [8, 16], strides = [1, 1]} : vector<8x48xf32> to vector<8x16xf32>
    %83 = vector.extract_strided_slice %78 {offsets = [0, 32], sizes = [8, 16], strides = [1, 1]} : vector<8x48xf32> to vector<8x16xf32>
    %84 = arith.mulf %82, %60 : vector<8x16xf32>
    %85 = arith.mulf %81, %80 : vector<8x16xf32>
    %86 = arith.addf %84, %85 : vector<8x16xf32>
    %87 = math.tanh %86 : vector<8x16xf32>
    %88 = arith.mulf %83, %87 : vector<8x16xf32>
    %89 = arith.index_cast %68 : i32 to index
    %c0_29 = arith.constant 0 : index
    %90 = vector.load %arg8[%89, %c0_29] : memref<64x16xf32, #tpu.memory_space<vmem>>, vector<8x16xf32>
    tpu.vector_store %arg8[%89, %c0_29], %88 {strides = array<i32>} : memref<64x16xf32, #tpu.memory_space<vmem>>, vector<8x16xf32>,
    %c3_i32 = arith.constant 3 : i32
    %c7_i32_30 = arith.constant 7 : i32
    %91 = arith.subi %c7_i32_30, %c3_i32 : i32
    %92 = arith.select %0, %c3_i32, %91 : i32
    %c8_i32_31 = arith.constant 8 : i32
    %93 = arith.muli %92, %c8_i32_31 : i32
    %94 = tpu.assume_multiple %93, 8 : i32
    %95 = arith.index_cast %94 : i32 to index
    %c0_32 = arith.constant 0 : index
    %96 = vector.load %arg7[%95, %c0_32] : memref<64x64xf32, #tpu.memory_space<vmem>>, vector<8x64xf32>
    %cst_33 = arith.constant dense<0.000000e+00> : vector<8x64xf32>
    %97 = tpu.matmul %88, %11, %cst_33 {dimension_numbers = #tpu.dot_dimension_numbers<[1], [0], [0], [1], [0, 0, 1, 1], [], []>} : vector<8x16xf32>, vector<16x64xf32>, vector<8x64xf32> -> vector<8x64xf32>
    %98 = arith.addf %96, %97 : vector<8x64xf32>
    %99 = vector.extract_strided_slice %98 {offsets = [0, 0], sizes = [8, 48], strides = [1, 1]} : vector<8x64xf32> to vector<8x48xf32>
    %100 = arith.negf %99 : vector<8x48xf32>
    %101 = math.exp %100 : vector<8x48xf32>
    %cst_34 = arith.constant 1.000000e+00 : f32
    %102 = vector.broadcast %cst_34 : f32 to vector<8x48xf32>
    %103 = arith.addf %102, %101 : vector<8x48xf32>
    %104 = arith.divf %102, %103 : vector<8x48xf32>
    %105 = vector.extract_strided_slice %98 {offsets = [0, 48], sizes = [8, 16], strides = [1, 1]} : vector<8x64xf32> to vector<8x16xf32>
    %106 = math.tanh %105 : vector<8x16xf32>
    %107 = vector.extract_strided_slice %104 {offsets = [0, 0], sizes = [8, 16], strides = [1, 1]} : vector<8x48xf32> to vector<8x16xf32>
    %108 = vector.extract_strided_slice %104 {offsets = [0, 16], sizes = [8, 16], strides = [1, 1]} : vector<8x48xf32> to vector<8x16xf32>
    %109 = vector.extract_strided_slice %104 {offsets = [0, 32], sizes = [8, 16], strides = [1, 1]} : vector<8x48xf32> to vector<8x16xf32>
    %110 = arith.mulf %108, %86 : vector<8x16xf32>
    %111 = arith.mulf %107, %106 : vector<8x16xf32>
    %112 = arith.addf %110, %111 : vector<8x16xf32>
    %113 = math.tanh %112 : vector<8x16xf32>
    %114 = arith.mulf %109, %113 : vector<8x16xf32>
    %115 = arith.index_cast %94 : i32 to index
    %c0_35 = arith.constant 0 : index
    %116 = vector.load %arg8[%115, %c0_35] : memref<64x16xf32, #tpu.memory_space<vmem>>, vector<8x16xf32>
    tpu.vector_store %arg8[%115, %c0_35], %114 {strides = array<i32>} : memref<64x16xf32, #tpu.memory_space<vmem>>, vector<8x16xf32>,
    %c4_i32 = arith.constant 4 : i32
    %c7_i32_36 = arith.constant 7 : i32
    %117 = arith.subi %c7_i32_36, %c4_i32 : i32
    %118 = arith.select %0, %c4_i32, %117 : i32
    %c8_i32_37 = arith.constant 8 : i32
    %119 = arith.muli %118, %c8_i32_37 : i32
    %120 = tpu.assume_multiple %119, 8 : i32
    %121 = arith.index_cast %120 : i32 to index
    %c0_38 = arith.constant 0 : index
    %122 = vector.load %arg7[%121, %c0_38] : memref<64x64xf32, #tpu.memory_space<vmem>>, vector<8x64xf32>
    %cst_39 = arith.constant dense<0.000000e+00> : vector<8x64xf32>
    %123 = tpu.matmul %114, %11, %cst_39 {dimension_numbers = #tpu.dot_dimension_numbers<[1], [0], [0], [1], [0, 0, 1, 1], [], []>} : vector<8x16xf32>, vector<16x64xf32>, vector<8x64xf32> -> vector<8x64xf32>
    %124 = arith.addf %122, %123 : vector<8x64xf32>
    %125 = vector.extract_strided_slice %124 {offsets = [0, 0], sizes = [8, 48], strides = [1, 1]} : vector<8x64xf32> to vector<8x48xf32>
    %126 = arith.negf %125 : vector<8x48xf32>
    %127 = math.exp %126 : vector<8x48xf32>
    %cst_40 = arith.constant 1.000000e+00 : f32
    %128 = vector.broadcast %cst_40 : f32 to vector<8x48xf32>
    %129 = arith.addf %128, %127 : vector<8x48xf32>
    %130 = arith.divf %128, %129 : vector<8x48xf32>
    %131 = vector.extract_strided_slice %124 {offsets = [0, 48], sizes = [8, 16], strides = [1, 1]} : vector<8x64xf32> to vector<8x16xf32>
    %132 = math.tanh %131 : vector<8x16xf32>
    %133 = vector.extract_strided_slice %130 {offsets = [0, 0], sizes = [8, 16], strides = [1, 1]} : vector<8x48xf32> to vector<8x16xf32>
    %134 = vector.extract_strided_slice %130 {offsets = [0, 16], sizes = [8, 16], strides = [1, 1]} : vector<8x48xf32> to vector<8x16xf32>
    %135 = vector.extract_strided_slice %130 {offsets = [0, 32], sizes = [8, 16], strides = [1, 1]} : vector<8x48xf32> to vector<8x16xf32>
    %136 = arith.mulf %134, %112 : vector<8x16xf32>
    %137 = arith.mulf %133, %132 : vector<8x16xf32>
    %138 = arith.addf %136, %137 : vector<8x16xf32>
    %139 = math.tanh %138 : vector<8x16xf32>
    %140 = arith.mulf %135, %139 : vector<8x16xf32>
    %141 = arith.index_cast %120 : i32 to index
    %c0_41 = arith.constant 0 : index
    %142 = vector.load %arg8[%141, %c0_41] : memref<64x16xf32, #tpu.memory_space<vmem>>, vector<8x16xf32>
    tpu.vector_store %arg8[%141, %c0_41], %140 {strides = array<i32>} : memref<64x16xf32, #tpu.memory_space<vmem>>, vector<8x16xf32>,
    %c5_i32 = arith.constant 5 : i32
    %c7_i32_42 = arith.constant 7 : i32
    %143 = arith.subi %c7_i32_42, %c5_i32 : i32
    %144 = arith.select %0, %c5_i32, %143 : i32
    %c8_i32_43 = arith.constant 8 : i32
    %145 = arith.muli %144, %c8_i32_43 : i32
    %146 = tpu.assume_multiple %145, 8 : i32
    %147 = arith.index_cast %146 : i32 to index
    %c0_44 = arith.constant 0 : index
    %148 = vector.load %arg7[%147, %c0_44] : memref<64x64xf32, #tpu.memory_space<vmem>>, vector<8x64xf32>
    %cst_45 = arith.constant dense<0.000000e+00> : vector<8x64xf32>
    %149 = tpu.matmul %140, %11, %cst_45 {dimension_numbers = #tpu.dot_dimension_numbers<[1], [0], [0], [1], [0, 0, 1, 1], [], []>} : vector<8x16xf32>, vector<16x64xf32>, vector<8x64xf32> -> vector<8x64xf32>
    %150 = arith.addf %148, %149 : vector<8x64xf32>
    %151 = vector.extract_strided_slice %150 {offsets = [0, 0], sizes = [8, 48], strides = [1, 1]} : vector<8x64xf32> to vector<8x48xf32>
    %152 = arith.negf %151 : vector<8x48xf32>
    %153 = math.exp %152 : vector<8x48xf32>
    %cst_46 = arith.constant 1.000000e+00 : f32
    %154 = vector.broadcast %cst_46 : f32 to vector<8x48xf32>
    %155 = arith.addf %154, %153 : vector<8x48xf32>
    %156 = arith.divf %154, %155 : vector<8x48xf32>
    %157 = vector.extract_strided_slice %150 {offsets = [0, 48], sizes = [8, 16], strides = [1, 1]} : vector<8x64xf32> to vector<8x16xf32>
    %158 = math.tanh %157 : vector<8x16xf32>
    %159 = vector.extract_strided_slice %156 {offsets = [0, 0], sizes = [8, 16], strides = [1, 1]} : vector<8x48xf32> to vector<8x16xf32>
    %160 = vector.extract_strided_slice %156 {offsets = [0, 16], sizes = [8, 16], strides = [1, 1]} : vector<8x48xf32> to vector<8x16xf32>
    %161 = vector.extract_strided_slice %156 {offsets = [0, 32], sizes = [8, 16], strides = [1, 1]} : vector<8x48xf32> to vector<8x16xf32>
    %162 = arith.mulf %160, %138 : vector<8x16xf32>
    %163 = arith.mulf %159, %158 : vector<8x16xf32>
    %164 = arith.addf %162, %163 : vector<8x16xf32>
    %165 = math.tanh %164 : vector<8x16xf32>
    %166 = arith.mulf %161, %165 : vector<8x16xf32>
    %167 = arith.index_cast %146 : i32 to index
    %c0_47 = arith.constant 0 : index
    %168 = vector.load %arg8[%167, %c0_47] : memref<64x16xf32, #tpu.memory_space<vmem>>, vector<8x16xf32>
    tpu.vector_store %arg8[%167, %c0_47], %166 {strides = array<i32>} : memref<64x16xf32, #tpu.memory_space<vmem>>, vector<8x16xf32>,
    %c6_i32 = arith.constant 6 : i32
    %c7_i32_48 = arith.constant 7 : i32
    %169 = arith.subi %c7_i32_48, %c6_i32 : i32
    %170 = arith.select %0, %c6_i32, %169 : i32
    %c8_i32_49 = arith.constant 8 : i32
    %171 = arith.muli %170, %c8_i32_49 : i32
    %172 = tpu.assume_multiple %171, 8 : i32
    %173 = arith.index_cast %172 : i32 to index
    %c0_50 = arith.constant 0 : index
    %174 = vector.load %arg7[%173, %c0_50] : memref<64x64xf32, #tpu.memory_space<vmem>>, vector<8x64xf32>
    %cst_51 = arith.constant dense<0.000000e+00> : vector<8x64xf32>
    %175 = tpu.matmul %166, %11, %cst_51 {dimension_numbers = #tpu.dot_dimension_numbers<[1], [0], [0], [1], [0, 0, 1, 1], [], []>} : vector<8x16xf32>, vector<16x64xf32>, vector<8x64xf32> -> vector<8x64xf32>
    %176 = arith.addf %174, %175 : vector<8x64xf32>
    %177 = vector.extract_strided_slice %176 {offsets = [0, 0], sizes = [8, 48], strides = [1, 1]} : vector<8x64xf32> to vector<8x48xf32>
    %178 = arith.negf %177 : vector<8x48xf32>
    %179 = math.exp %178 : vector<8x48xf32>
    %cst_52 = arith.constant 1.000000e+00 : f32
    %180 = vector.broadcast %cst_52 : f32 to vector<8x48xf32>
    %181 = arith.addf %180, %179 : vector<8x48xf32>
    %182 = arith.divf %180, %181 : vector<8x48xf32>
    %183 = vector.extract_strided_slice %176 {offsets = [0, 48], sizes = [8, 16], strides = [1, 1]} : vector<8x64xf32> to vector<8x16xf32>
    %184 = math.tanh %183 : vector<8x16xf32>
    %185 = vector.extract_strided_slice %182 {offsets = [0, 0], sizes = [8, 16], strides = [1, 1]} : vector<8x48xf32> to vector<8x16xf32>
    %186 = vector.extract_strided_slice %182 {offsets = [0, 16], sizes = [8, 16], strides = [1, 1]} : vector<8x48xf32> to vector<8x16xf32>
    %187 = vector.extract_strided_slice %182 {offsets = [0, 32], sizes = [8, 16], strides = [1, 1]} : vector<8x48xf32> to vector<8x16xf32>
    %188 = arith.mulf %186, %164 : vector<8x16xf32>
    %189 = arith.mulf %185, %184 : vector<8x16xf32>
    %190 = arith.addf %188, %189 : vector<8x16xf32>
    %191 = math.tanh %190 : vector<8x16xf32>
    %192 = arith.mulf %187, %191 : vector<8x16xf32>
    %193 = arith.index_cast %172 : i32 to index
    %c0_53 = arith.constant 0 : index
    %194 = vector.load %arg8[%193, %c0_53] : memref<64x16xf32, #tpu.memory_space<vmem>>, vector<8x16xf32>
    tpu.vector_store %arg8[%193, %c0_53], %192 {strides = array<i32>} : memref<64x16xf32, #tpu.memory_space<vmem>>, vector<8x16xf32>,
    %c7_i32_54 = arith.constant 7 : i32
    %c7_i32_55 = arith.constant 7 : i32
    %195 = arith.subi %c7_i32_55, %c7_i32_54 : i32
    %196 = arith.select %0, %c7_i32_54, %195 : i32
    %c8_i32_56 = arith.constant 8 : i32
    %197 = arith.muli %196, %c8_i32_56 : i32
    %198 = tpu.assume_multiple %197, 8 : i32
    %199 = arith.index_cast %198 : i32 to index
    %c0_57 = arith.constant 0 : index
    %200 = vector.load %arg7[%199, %c0_57] : memref<64x64xf32, #tpu.memory_space<vmem>>, vector<8x64xf32>
    %cst_58 = arith.constant dense<0.000000e+00> : vector<8x64xf32>
    %201 = tpu.matmul %192, %11, %cst_58 {dimension_numbers = #tpu.dot_dimension_numbers<[1], [0], [0], [1], [0, 0, 1, 1], [], []>} : vector<8x16xf32>, vector<16x64xf32>, vector<8x64xf32> -> vector<8x64xf32>
    %202 = arith.addf %200, %201 : vector<8x64xf32>
    %203 = vector.extract_strided_slice %202 {offsets = [0, 0], sizes = [8, 48], strides = [1, 1]} : vector<8x64xf32> to vector<8x48xf32>
    %204 = arith.negf %203 : vector<8x48xf32>
    %205 = math.exp %204 : vector<8x48xf32>
    %cst_59 = arith.constant 1.000000e+00 : f32
    %206 = vector.broadcast %cst_59 : f32 to vector<8x48xf32>
    %207 = arith.addf %206, %205 : vector<8x48xf32>
    %208 = arith.divf %206, %207 : vector<8x48xf32>
    %209 = vector.extract_strided_slice %202 {offsets = [0, 48], sizes = [8, 16], strides = [1, 1]} : vector<8x64xf32> to vector<8x16xf32>
    %210 = math.tanh %209 : vector<8x16xf32>
    %211 = vector.extract_strided_slice %208 {offsets = [0, 0], sizes = [8, 16], strides = [1, 1]} : vector<8x48xf32> to vector<8x16xf32>
    %212 = vector.extract_strided_slice %208 {offsets = [0, 16], sizes = [8, 16], strides = [1, 1]} : vector<8x48xf32> to vector<8x16xf32>
    %213 = vector.extract_strided_slice %208 {offsets = [0, 32], sizes = [8, 16], strides = [1, 1]} : vector<8x48xf32> to vector<8x16xf32>
    %214 = arith.mulf %212, %190 : vector<8x16xf32>
    %215 = arith.mulf %211, %210 : vector<8x16xf32>
    %216 = arith.addf %214, %215 : vector<8x16xf32>
    %217 = math.tanh %216 : vector<8x16xf32>
    %218 = arith.mulf %213, %217 : vector<8x16xf32>
    %219 = arith.index_cast %198 : i32 to index
    %c0_60 = arith.constant 0 : index
    %220 = vector.load %arg8[%219, %c0_60] : memref<64x16xf32, #tpu.memory_space<vmem>>, vector<8x16xf32>
    tpu.vector_store %arg8[%219, %c0_60], %218 {strides = array<i32>} : memref<64x16xf32, #tpu.memory_space<vmem>>, vector<8x16xf32>,
    %c8_i32_61 = arith.constant 8 : i32
    %c0_62 = arith.constant 0 : index
    %c0_63 = arith.constant 0 : index
    %221 = vector.load %arg8[%c0_62, %c0_63] : memref<64x16xf32, #tpu.memory_space<vmem>>, vector<64x16xf32>
    %c0_64 = arith.constant 0 : index
    %c0_65 = arith.constant 0 : index
    %c0_66 = arith.constant 0 : index
    %222 = vector.load %arg5[%c0_64, %c0_65, %c0_66] : memref<1x16x128xf32, #tpu.memory_space<vmem>>, vector<1x16x128xf32>
    %223 = vector.shape_cast %222 : vector<1x16x128xf32> to vector<16x128xf32>
    %cst_67 = arith.constant dense<0.000000e+00> : vector<64x128xf32>
    %224 = tpu.matmul %221, %223, %cst_67 {dimension_numbers = #tpu.dot_dimension_numbers<[1], [0], [0], [1], [0, 0, 1, 1], [], []>} : vector<64x16xf32>, vector<16x128xf32>, vector<64x128xf32> -> vector<64x128xf32>
    %c0_68 = arith.constant 0 : index
    %c0_69 = arith.constant 0 : index
    %c0_70 = arith.constant 0 : index
    %225 = vector.load %arg6[%c0_68, %c0_69, %c0_70] : memref<1x64x128xf32, #tpu.memory_space<vmem>>, vector<1x64x128xf32>
    %226 = vector.shape_cast %225 : vector<1x64x128xf32> to vector<64x128xf32>
    %227 = vector.shape_cast %224 : vector<64x128xf32> to vector<1x64x128xf32>
    tpu.vector_store %arg6[%c0_68, %c0_69, %c0_70], %227 {strides = array<i32>} : memref<1x64x128xf32, #tpu.memory_space<vmem>>, vector<1x64x128xf32>,
    return
  }
  func.func @transform_0(%arg0: i32) -> (i32, i32) {
    %c0_i32 = arith.constant 0 : i32
    %c0_i32_0 = arith.constant 0 : i32
    %c0_i32_1 = arith.constant 0 : i32
    return %c0_i32, %c0_i32_0 : i32, i32
  }
  func.func @transform_1(%arg0: i32) -> (i32, i32, i32) {
    %c0_i32 = arith.constant 0 : i32
    %c0_i32_0 = arith.constant 0 : i32
    %c0_i32_1 = arith.constant 0 : i32
    return %arg0, %c0_i32, %c0_i32_0 : i32, i32, i32
  }
  func.func @transform_2(%arg0: i32) -> (i32, i32, i32) {
    %c0_i32 = arith.constant 0 : i32
    %c0_i32_0 = arith.constant 0 : i32
    %c0_i32_1 = arith.constant 0 : i32
    return %arg0, %c0_i32, %c0_i32_0 : i32, i32, i32
  }
  func.func @transform_3(%arg0: i32) -> (i32, i32, i32) {
    %c0_i32 = arith.constant 0 : i32
    %c0_i32_0 = arith.constant 0 : i32
    %c0_i32_1 = arith.constant 0 : i32
    return %arg0, %c0_i32, %c0_i32_0 : i32, i32, i32
  }
  func.func @transform_4(%arg0: i32) -> (i32, i32, i32) {
    %c0_i32 = arith.constant 0 : i32
    %c0_i32_0 = arith.constant 0 : i32
    %c0_i32_1 = arith.constant 0 : i32
    return %arg0, %c0_i32, %c0_i32_0 : i32, i32, i32
  }
  func.func @transform_5(%arg0: i32) -> (i32, i32, i32) {
    %c0_i32 = arith.constant 0 : i32
    %c0_i32_0 = arith.constant 0 : i32
    %c0_i32_1 = arith.constant 0 : i32
    return %arg0, %c0_i32, %c0_i32_0 : i32, i32, i32
  }
}

</mosaic_0001>

<llo_original>
// kernel: bilstm_crf_forward.1
$region0: #{bilstm_crf_forward.1}
  #allocation0 [shape = 'u32[]', space=smem, size = 0x4, offset = 0x4, fixed_abs, tag = 'smem constant byte address 0x4 - core index']
  #allocation1 [shape = 'u32[144,128]{1,0:T(1,128)}', space=vmem, size = 0x12000, scoped, tag = 'internal scratch']
  #allocation2 [shape = 'f32[64,64]{1,0:T(8,128)}', space=vmem, size = 0x8000, scoped, tag = 'scratch operand']
  #allocation3 [shape = 'f32[64,16]{1,0:T(8,128)}', space=vmem, size = 0x8000, scoped, tag = 'scratch operand']
  %s0 = inlined_call_operand.vmem [shape: f32[64,16], index: 0, kind: input, shape index: {}]
  %s1 = inlined_call_operand.vmem [shape: f32[2,16,64], index: 1, kind: input, shape index: {}]
  %s2 = inlined_call_operand.vmem [shape: f32[2,16,64], index: 2, kind: input, shape index: {}]
  %s3 = inlined_call_operand.vmem [shape: f32[2,1,64], index: 3, kind: input, shape index: {}]
  %s4 = inlined_call_operand.vmem [shape: f32[2,16,128], index: 4, kind: input, shape index: {}]
  %s5 = inlined_call_operand.vmem [shape: f32[2,64,128], index: 5, kind: output, shape index: {}]
  %s6 = sld [smem:[#allocation0]]
  $region53: #{bilstm_crf_forward.1} parent=0
    _
  %s8 = ssub.s32 1, %s6
  %s9 = scalar_select 0, %s8, %s6
  loop: start=0, step=1, limit=4
  $region2: #{bilstm_crf_forward.1} parent=0 // loop_pre_header
    _
  $region3: #{bilstm_crf_forward.1} parent=0 // loop_header
    %s11 = sphi 0, %s15
    %p12 = scmp.ge.s32.totalorder %s11, 4
    %s19 = sphi 0, %s19
    %s21 = sphi 0, %s19
    %s22 = sphi 0, %s21
    %s36 = sphi 0, %s22
    %s42 = sphi 0, %s44
    %s45 = sphi 0, %s42
    %s46 = sphi 0, %s45
    %s62 = sphi 0, %s46
    %s68 = sphi 0, %s70
    %s71 = sphi 0, %s68
    %s72 = sphi 0, %s71
    %s88 = sphi 0, %s72
    %s94 = sphi 0, %s96
    %s97 = sphi 0, %s94
    %s98 = sphi 0, %s97
    %s114 = sphi 0, %s98
    %s120 = sphi 0, %s122
    %s123 = sphi 0, %s120
    %s124 = sphi 0, %s123
    %s140 = sphi 0, %s124
    %s146 = sphi 0, %s148
    %s149 = sphi 0, %s146
    %s150 = sphi 0, %s149
    %s166 = sphi 0, %s150
  $region4: #{bilstm_crf_forward.1} parent=0 // loop_header_branch
    %14 = sbr.rel (%p12) target = $region8
  $region5: #{bilstm_crf_forward.1} parent=0 // loop_body
    %s16 = ssub.s32 %s11, 1
    %s17 = ssub.s32 %s11, 2
    %s18 = sadd.s32 %s11, 1
    %s20 = sadd.s32 %s19, 1
    %p23 = scmp.eq.s32.totalorder %s11, 1
    %p24 = scmp.ne.s32.totalorder %s19, %s21
    %p25 = scmp.eq.s32.totalorder %s11, 0
    %p26 = por %p24, %p25
    %p27 = scmp.ne.s32.totalorder %s19, %s21
    %p28 = scmp.eq.s32.totalorder %s16, 1
    %p29 = por %p27, %p28
    %p30 = scmp.ne.s32.totalorder %s21, %s22
    %p31 = scmp.eq.s32.totalorder %s16, 0
    %p32 = por %p30, %p31
    %p33 = scmp.ne.s32.totalorder %s21, %s22
    %p34 = scmp.eq.s32.totalorder %s17, 1
    %p35 = por %p33, %p34
    %p37 = scmp.ne.s32.totalorder %s22, %s36
    %p38 = scmp.eq.s32.totalorder %s17, 0
    %p39 = por %p37, %p38
    %s40 = ssub.s32 %s11, %s18
    %p41 = scmp.eq.s32.totalorder %s40, 0
    %s43 = sadd.s32 %s42, 1
    %s44 = scalar_select %p41, %s42, %s43
    %p47 = pneg %p41
    %p48 = scmp.eq.s32.totalorder %s11, 1
    %p49 = por %p47, %p48
    %p50 = scmp.ne.s32.totalorder %s42, %s45
    %p51 = scmp.eq.s32.totalorder %s11, 0
    %p52 = por %p50, %p51
    %p53 = scmp.ne.s32.totalorder %s42, %s45
    %p54 = scmp.eq.s32.totalorder %s16, 1
    %p55 = por %p53, %p54
    %p56 = scmp.ne.s32.totalorder %s45, %s46
    %p57 = scmp.eq.s32.totalorder %s16, 0
    %p58 = por %p56, %p57
    %p59 = scmp.ne.s32.totalorder %s45, %s46
    %p60 = scmp.eq.s32.totalorder %s17, 1
    %p61 = por %p59, %p60
    %p63 = scmp.ne.s32.totalorder %s46, %s62
    %p64 = scmp.eq.s32.totalorder %s17, 0
    %p65 = por %p63, %p64
    %s66 = ssub.s32 %s11, %s18
    %p67 = scmp.eq.s32.totalorder %s66, 0
    %s69 = sadd.s32 %s68, 1
    %s70 = scalar_select %p67, %s68, %s69
    %p73 = pneg %p67
    %p74 = scmp.eq.s32.totalorder %s11, 1
    %p75 = por %p73, %p74
    %p76 = scmp.ne.s32.totalorder %s68, %s71
    %p77 = scmp.eq.s32.totalorder %s11, 0
    %p78 = por %p76, %p77
    %p79 = scmp.ne.s32.totalorder %s68, %s71
    %p80 = scmp.eq.s32.totalorder %s16, 1
    %p81 = por %p79, %p80
    %p82 = scmp.ne.s32.totalorder %s71, %s72
    %p83 = scmp.eq.s32.totalorder %s16, 0
    %p84 = por %p82, %p83
    %p85 = scmp.ne.s32.totalorder %s71, %s72
    %p86 = scmp.eq.s32.totalorder %s17, 1
    %p87 = por %p85, %p86
    %p89 = scmp.ne.s32.totalorder %s72, %s88
    %p90 = scmp.eq.s32.totalorder %s17, 0
    %p91 = por %p89, %p90
    %s92 = ssub.s32 %s11, %s18
    %p93 = scmp.eq.s32.totalorder %s92, 0
    %s95 = sadd.s32 %s94, 1
    %s96 = scalar_select %p93, %s94, %s95
    %p99 = pneg %p93
    %p100 = scmp.eq.s32.totalorder %s11, 1
    %p101 = por %p99, %p100
    %p102 = scmp.ne.s32.totalorder %s94, %s97
    %p103 = scmp.eq.s32.totalorder %s11, 0
    %p104 = por %p102, %p103
    %p105 = scmp.ne.s32.totalorder %s94, %s97
    %p106 = scmp.eq.s32.totalorder %s16, 1
    %p107 = por %p105, %p106
    %p108 = scmp.ne.s32.totalorder %s97, %s98
    %p109 = scmp.eq.s32.totalorder %s16, 0
    %p110 = por %p108, %p109
    %p111 = scmp.ne.s32.totalorder %s97, %s98
    %p112 = scmp.eq.s32.totalorder %s17, 1
    %p113 = por %p111, %p112
    %p115 = scmp.ne.s32.totalorder %s98, %s114
    %p116 = scmp.eq.s32.totalorder %s17, 0
    %p117 = por %p115, %p116
    %s118 = ssub.s32 %s11, %s18
    %p119 = scmp.eq.s32.totalorder %s118, 0
    %s121 = sadd.s32 %s120, 1
    %s122 = scalar_select %p119, %s120, %s121
    %p125 = pneg %p119
    %p126 = scmp.eq.s32.totalorder %s11, 1
    %p127 = por %p125, %p126
    %p128 = scmp.ne.s32.totalorder %s120, %s123
    %p129 = scmp.eq.s32.totalorder %s11, 0
    %p130 = por %p128, %p129
    %p131 = scmp.ne.s32.totalorder %s120, %s123
    %p132 = scmp.eq.s32.totalorder %s16, 1
    %p133 = por %p131, %p132
    %p134 = scmp.ne.s32.totalorder %s123, %s124
    %p135 = scmp.eq.s32.totalorder %s16, 0
    %p136 = por %p134, %p135
    %p137 = scmp.ne.s32.totalorder %s123, %s124
    %p138 = scmp.eq.s32.totalorder %s17, 1
    %p139 = por %p137, %p138
    %p141 = scmp.ne.s32.totalorder %s124, %s140
    %p142 = scmp.eq.s32.totalorder %s17, 0
    %p143 = por %p141, %p142
    %s144 = ssub.s32 %s11, %s18
    %p145 = scmp.eq.s32.totalorder %s144, 0
    %s147 = sadd.s32 %s146, 1
    %s148 = scalar_select %p145, %s146, %s147
    %p151 = pneg %p145
    %p152 = scmp.eq.s32.totalorder %s11, 1
    %p153 = por %p151, %p152
    %p154 = scmp.ne.s32.totalorder %s146, %s149
    %p155 = scmp.eq.s32.totalorder %s11, 0
    %p156 = por %p154, %p155
    %p157 = scmp.ne.s32.totalorder %s146, %s149
    %p158 = scmp.eq.s32.totalorder %s16, 1
    %p159 = por %p157, %p158
    %p160 = scmp.ne.s32.totalorder %s149, %s150
    %p161 = scmp.eq.s32.totalorder %s16, 0
    %p162 = por %p160, %p161
    %p163 = scmp.ne.s32.totalorder %s149, %s150
    %p164 = scmp.eq.s32.totalorder %s17, 1
    %p165 = por %p163, %p164
    %p167 = scmp.ne.s32.totalorder %s150, %s166
    %p168 = scmp.eq.s32.totalorder %s17, 0
    %p169 = por %p167, %p168
    %p170 = scmp.le.s32.totalorder 1, %s11
    %p171 = scmp.lt.s32.totalorder %s11, 3
    %p172 = pnand %p170, %p171
    %p173 = pneg %p172
    // Predicated region
    $region9: #{bilstm_crf_forward.1} parent=5 // pred_check
      _
    $region10: #{bilstm_crf_forward.1} parent=5 // pred_check_branch
      %175 = sbr.rel (%p172) target = $region12
    $region11: #{bilstm_crf_forward.1} parent=5 // pred_region
      %s176 = ssub.s32 %s11, 1
      // Predicated region
      $region13: #{bilstm_crf_forward.1} parent=11 // pred_check
        %p177 = pneg %p32
      $region14: #{bilstm_crf_forward.1} parent=11 // pred_check_branch
        %179 = sbr.rel (%p177) target = $region16
      $region15: #{bilstm_crf_forward.1} parent=11 // pred_region
        _
      $region16: #{bilstm_crf_forward.1} parent=11 // pred_fallthru
        _
    $region12: #{bilstm_crf_forward.1} parent=5 // pred_fallthru
      _
    %p180 = scmp.lt.s32.totalorder %s11, 2
    // Predicated region
    $region17: #{bilstm_crf_forward.1} parent=5 // pred_check
      %p181 = pneg %p180
    $region18: #{bilstm_crf_forward.1} parent=5 // pred_check_branch
      %183 = sbr.rel (%p181) target = $region20
    $region19: #{bilstm_crf_forward.1} parent=5 // pred_region
      // Predicated region
      $region21: #{bilstm_crf_forward.1} parent=19 // pred_check
        %p184 = pneg %p52
      $region22: #{bilstm_crf_forward.1} parent=19 // pred_check_branch
        %186 = sbr.rel (%p184) target = $region24
      $region23: #{bilstm_crf_forward.1} parent=19 // pred_region
        %p187 = scmp.lt.s32.totalorder %s11, 1
        %s188 = scalar_select %p187, %s11, 1
        %s189 = smul.addr %s188, 2
        %s190 = smul.addr %s189, 8
        %s191 = scalar_lea.vmem %s1, %s190
      $region24: #{bilstm_crf_forward.1} parent=19 // pred_fallthru
        _
      // Predicated region
      $region25: #{bilstm_crf_forward.1} parent=19 // pred_check
        %p192 = pneg %p78
      $region26: #{bilstm_crf_forward.1} parent=19 // pred_check_branch
        %194 = sbr.rel (%p192) target = $region28
      $region27: #{bilstm_crf_forward.1} parent=19 // pred_region
        %p195 = scmp.lt.s32.totalorder %s11, 1
        %s196 = scalar_select %p195, %s11, 1
        %s197 = smul.addr %s196, 2
        %s198 = smul.addr %s197, 8
        %s199 = scalar_lea.vmem %s2, %s198
      $region28: #{bilstm_crf_forward.1} parent=19 // pred_fallthru
        _
      // Predicated region
      $region29: #{bilstm_crf_forward.1} parent=19 // pred_check
        %p200 = pneg %p104
      $region30: #{bilstm_crf_forward.1} parent=19 // pred_check_branch
        %202 = sbr.rel (%p200) target = $region32
      $region31: #{bilstm_crf_forward.1} parent=19 // pred_region
        %p203 = scmp.lt.s32.totalorder %s11, 1
        %s204 = scalar_select %p203, %s11, 1
        %s205 = scalar_lea.vmem %s3, %s204
      $region32: #{bilstm_crf_forward.1} parent=19 // pred_fallthru
        _
      // Predicated region
      $region33: #{bilstm_crf_forward.1} parent=19 // pred_check
        %p206 = pneg %p130
      $region34: #{bilstm_crf_forward.1} parent=19 // pred_check_branch
        %208 = sbr.rel (%p206) target = $region36
      $region35: #{bilstm_crf_forward.1} parent=19 // pred_region
        %p209 = scmp.lt.s32.totalorder %s11, 1
        %s210 = scalar_select %p209, %s11, 1
        %s211 = smul.addr %s210, 2
        %s212 = smul.addr %s211, 8
        %s213 = scalar_lea.vmem %s4, %s212
      $region36: #{bilstm_crf_forward.1} parent=19 // pred_fallthru
        _
    $region20: #{bilstm_crf_forward.1} parent=5 // pred_fallthru
      _
    %p214 = scmp.le.s32.totalorder 1, %s11
    %p215 = scmp.lt.s32.totalorder %s11, 3
    %p216 = pnand %p214, %p215
    %p217 = pneg %p216
    // Predicated region
    $region37: #{bilstm_crf_forward.1} parent=5 // pred_check
      _
    $region38: #{bilstm_crf_forward.1} parent=5 // pred_check_branch
      %219 = sbr.rel (%p216) target = $region40
    $region39: #{bilstm_crf_forward.1} parent=5 // pred_region
      %s220 = ssub.s32 %s11, 1
      %p221 = pneg %p32
      %p222 = pneg %p29
      %p223 = scmp.lt.s32.totalorder %s16, 1
      %s224 = scalar_select %p223, %s16, 1
      %s225 = smul.addr %s224, 2
      %s226 = smul.addr %s225, 8
      %s227 = scalar_lea.vmem %s1, %s226
      %p228 = pneg %p58
      %p229 = pneg %p55
      %p230 = scmp.lt.s32.totalorder %s16, 1
      %s231 = scalar_select %p230, %s16, 1
      %s232 = smul.addr %s231, 2
      %s233 = smul.addr %s232, 8
      %s234 = scalar_lea.vmem %s2, %s233
      %p235 = pneg %p84
      %p236 = pneg %p81
      %p237 = scmp.lt.s32.totalorder %s16, 1
      %s238 = scalar_select %p237, %s16, 1
      %s239 = scalar_lea.vmem %s3, %s238
      %p240 = pneg %p110
      %p241 = pneg %p107
      %p242 = scmp.lt.s32.totalorder %s16, 1
      %s243 = scalar_select %p242, %s16, 1
      %s244 = smul.addr %s243, 2
      %s245 = smul.addr %s244, 8
      %s246 = scalar_lea.vmem %s4, %s245
      %p247 = pneg %p136
      %p248 = pneg %p133
      %p249 = pneg %p162
      %p250 = pneg %p159
      %p251 = scmp.lt.s32.totalorder %s16, 1
      %s252 = scalar_select %p251, %s16, 1
      %s253 = smul.addr %s252, 8
      %s254 = smul.addr %s253, 8
      %s255 = scalar_lea.vmem %s5, %s254
      %p256 = scmp.lt.s32.totalorder %s16, 1
      %s257 = scalar_select %p256, %s16, 1
      %s258 = smul.addr %s257, 2
      %s259 = smul.addr %s258, 8
      %s260 = scalar_lea.vmem %s1, %s259
      %p261 = scmp.lt.s32.totalorder %s16, 1
      %s262 = scalar_select %p261, %s16, 1
      %s263 = smul.addr %s262, 2
      %s264 = smul.addr %s263, 8
      %s265 = scalar_lea.vmem %s2, %s264
      %p266 = scmp.lt.s32.totalorder %s16, 1
      %s267 = scalar_select %p266, %s16, 1
      %s268 = scalar_lea.vmem %s3, %s267
      %p269 = scmp.lt.s32.totalorder %s16, 1
      %s270 = scalar_select %p269, %s16, 1
      %s271 = smul.addr %s270, 2
      %s272 = smul.addr %s271, 8
      %s273 = scalar_lea.vmem %s4, %s272
      %p274 = scmp.lt.s32.totalorder %s16, 1
      %s275 = scalar_select %p274, %s16, 1
      %s276 = smul.addr %s275, 8
      %s277 = smul.addr %s276, 8
      %s278 = scalar_lea.vmem %s5, %s277
      %p279 = scmp.eq.s32.totalorder %s16, 0
      %v280 = vld [vmem:[%s0] sm:$0xff]
      %v281 = vld [vmem:[%s0 + $0x8] sm:$0xff]
      %v282 = vld [vmem:[%s0 + $0x10] sm:$0xff]
      %v283 = vld [vmem:[%s0 + $0x18] sm:$0xff]
      %v284 = vld [vmem:[%s0 + $0x20] sm:$0xff]
      %v285 = vld [vmem:[%s0 + $0x28] sm:$0xff]
      %v286 = vld [vmem:[%s0 + $0x30] sm:$0xff]
      %v287 = vld [vmem:[%s0 + $0x38] sm:$0xff]
      %v288 = vld [vmem:[%s260] sm:$0xff]
      %v289 = vld [vmem:[%s260 + $0x8] sm:$0xff]
      %v290 = vld [vmem:[%s268] sm:$0x1]
      %v292 = vlaneseq
      %v293 = vshrl.u32 %v292, 7
      %v294 = vsub.s32 0, %v293
      %v295 = vrot.slane %v290, %v294
      %vm297 = vcmask 130048
      %v299 = vsel %vm297, %v280, 0
      %v302 = vsel %vm297, %v281, 0
      %v305 = vsel %vm297, %v282, 0
      %v308 = vsel %vm297, %v283, 0
      %v311 = vsel %vm297, %v284, 0
      %v314 = vsel %vm297, %v285, 0
      %v317 = vsel %vm297, %v286, 0
      %v320 = vsel %vm297, %v287, 0
      %322 = vmatprep.subr.mxu0 0.0
      %323 = vmatpush1.msra.mxu0 %v288
      %324 = vmatprep.subr.mxu0 0.0
      %325 = vmatpush1.msra.mxu0 %v289
      %326 = vmatprep.subr.mxu0 0.0
      %327 = vmatpush1.msra.mxu0 0.0
      %328 = vmatprep.subr.mxu0 0.0
      %329 = vmatpush1.msra.mxu0 0.0
      %330 = vmatprep.subr.mxu0 0.0
      %331 = vmatpush1.msra.mxu0 0.0
      %332 = vmatprep.subr.mxu0 0.0
      %333 = vmatpush1.msra.mxu0 0.0
      %334 = vmatprep.subr.mxu0 0.0
      %335 = vmatpush1.msra.mxu0 0.0
      %336 = vmatprep.subr.mxu0 0.0
      %337 = vmatpush1.msra.mxu0 0.0
      %338 = vmatprep.subr.mxu0 0.0
      %339 = vmatpush1.msra.mxu0 0.0
      %340 = vmatprep.subr.mxu0 0.0
      %341 = vmatpush1.msra.mxu0 0.0
      %342 = vmatprep.subr.mxu0 0.0
      %343 = vmatpush1.msra.mxu0 0.0
      %344 = vmatprep.subr.mxu0 0.0
      %345 = vmatpush1.msra.mxu0 0.0
      %346 = vmatprep.subr.mxu0 0.0
      %347 = vmatpush1.msra.mxu0 0.0
      %348 = vmatprep.subr.mxu0 0.0
      %349 = vmatpush1.msra.mxu0 0.0
      %350 = vmatprep.subr.mxu0 0.0
      %351 = vmatpush1.msra.mxu0 0.0
      %352 = vmatprep.subr.mxu0 0.0
      %353 = vmatpush1.msra.mxu0 0.0
      %354 = vmatprep.subr.mxu0 0.0
      %355 = vmatpush1.msra.mxu0 0.0
      %356 = vmatprep.subr.mxu0 0.0
      %357 = vmatpush1.msra.mxu0 0.0
      %358 = vmatprep.subr.mxu0 0.0
      %359 = vmatpush1.msra.mxu0 0.0
      %360 = vmatprep.subr.mxu0 0.0
      %361 = vmatpush1.msra.mxu0 0.0
      %362 = vmatprep.subr.mxu0 0.0
      %363 = vmatpush1.msra.mxu0 0.0
      %364 = vmatprep.subr.mxu0 0.0
      %365 = vmatpush1.msra.mxu0 0.0
      %366 = vmatprep.subr.mxu0 0.0
      %367 = vmatpush1.msra.mxu0 0.0
      %368 = vmatprep.subr.mxu0 0.0
      %369 = vmatpush1.msra.mxu0 0.0
      %370 = vmatprep.subr.mxu0 0.0
      %371 = vmatpush1.msra.mxu0 0.0
      %372 = vmatprep.subr.mxu0 0.0
      %373 = vmatpush1.msra.mxu0 0.0
      %374 = vmatprep.subr.mxu0 0.0
      %375 = vmatpush1.msra.mxu0 0.0
      %376 = vmatprep.subr.mxu0 0.0
      %377 = vmatpush1.msra.mxu0 0.0
      %378 = vmatprep.subr.mxu0 0.0
      %379 = vmatpush1.msra.mxu0 0.0
      %380 = vmatprep.subr.mxu0 0.0
      %381 = vmatpush1.msra.mxu0 0.0
      %382 = vmatprep.subr.mxu0 0.0
      %383 = vmatpush1.msra.mxu0 0.0
      %384 = vmatprep.subr.mxu0 0.0
      %385 = vmatpush1.msra.mxu0 0.0
      %386 = vmatprep.mubr.f32.mxu0 0.0
      %387 = vmatmul.mubr.f32.gmra.mrb[0].mxu0 %v299
      %v388 = vpop.f32.mrb[0].mxu0
      %v389 = vadd.f32 %v295, %v388
      %v390 = vpop.f32.mrb[0].mxu0
      %391 = vmatprep.mubr.f32.mxu0 0.0
      %392 = vmatmul.mubr.f32.gmra.mrb[0].mxu0 %v302
      %v393 = vpop.f32.mrb[0].mxu0
      %v394 = vadd.f32 %v295, %v393
      %v395 = vpop.f32.mrb[0].mxu0
      %396 = vmatprep.mubr.f32.mxu0 0.0
      %397 = vmatmul.mubr.f32.gmra.mrb[0].mxu0 %v305
      %v398 = vpop.f32.mrb[0].mxu0
      %v399 = vadd.f32 %v295, %v398
      %v400 = vpop.f32.mrb[0].mxu0
      %401 = vmatprep.mubr.f32.mxu0 0.0
      %402 = vmatmul.mubr.f32.gmra.mrb[0].mxu0 %v308
      %v403 = vpop.f32.mrb[0].mxu0
      %v404 = vadd.f32 %v295, %v403
      %v405 = vpop.f32.mrb[0].mxu0
      %406 = vmatprep.mubr.f32.mxu0 0.0
      %407 = vmatmul.mubr.f32.gmra.mrb[0].mxu0 %v311
      %v408 = vpop.f32.mrb[0].mxu0
      %v409 = vadd.f32 %v295, %v408
      %v410 = vpop.f32.mrb[0].mxu0
      %411 = vmatprep.mubr.f32.mxu0 0.0
      %412 = vmatmul.mubr.f32.gmra.mrb[0].mxu0 %v314
      %v413 = vpop.f32.mrb[0].mxu0
      %v414 = vadd.f32 %v295, %v413
      %v415 = vpop.f32.mrb[0].mxu0
      %416 = vmatprep.mubr.f32.mxu0 0.0
      %417 = vmatmul.mubr.f32.gmra.mrb[0].mxu0 %v317
      %v418 = vpop.f32.mrb[0].mxu0
      %v419 = vadd.f32 %v295, %v418
      %v420 = vpop.f32.mrb[0].mxu0
      %421 = vmatprep.mubr.f32.mxu0 0.0
      %422 = vmatmul.mubr.f32.gmra.mrb[0].mxu0 %v320
      %v423 = vpop.f32.mrb[0].mxu0
      %v424 = vadd.f32 %v295, %v423
      %v425 = vpop.f32.mrb[0].mxu0
      %426 = vdwg.mxu0
      %vm427 = vcmask 523264
      %428 = vst.msk [vmem:[#allocation2] sm:$0xff] %vm427, %v389
      %429 = vst.msk [vmem:[#allocation2 + $0x8] sm:$0xff] %vm427, %v394
      %430 = vst.msk [vmem:[#allocation2 + $0x10] sm:$0xff] %vm427, %v399
      %431 = vst.msk [vmem:[#allocation2 + $0x18] sm:$0xff] %vm427, %v404
      %432 = vst.msk [vmem:[#allocation2 + $0x20] sm:$0xff] %vm427, %v409
      %433 = vst.msk [vmem:[#allocation2 + $0x28] sm:$0xff] %vm427, %v414
      %434 = vst.msk [vmem:[#allocation2 + $0x30] sm:$0xff] %vm427, %v419
      %435 = vst.msk [vmem:[#allocation2 + $0x38] sm:$0xff] %vm427, %v424
      %v436 = vld [vmem:[%s265] sm:$0xff]
      %v437 = vld [vmem:[%s265 + $0x8] sm:$0xff]
      %s438 = scalar_select %p279, 0, 7
      %s439 = smul.u32 %s438, 8
      %s440 = scalar_lea.vmem [#allocation2], %s439
      %v441 = vld [vmem:[%s440] sm:$0xff]
      %v443 = vsel %vm297, 0.0, 0
      %445 = vmatprep.subr.mxu0 0.0
      %446 = vmatpush1.msra.mxu0 %v436
      %447 = vmatprep.subr.mxu0 0.0
      %448 = vmatpush1.msra.mxu0 %v437
      %449 = vmatprep.subr.mxu0 0.0
      %450 = vmatpush1.msra.mxu0 0.0
      %451 = vmatprep.subr.mxu0 0.0
      %452 = vmatpush1.msra.mxu0 0.0
      %453 = vmatprep.subr.mxu0 0.0
      %454 = vmatpush1.msra.mxu0 0.0
      %455 = vmatprep.subr.mxu0 0.0
      %456 = vmatpush1.msra.mxu0 0.0
      %457 = vmatprep.subr.mxu0 0.0
      %458 = vmatpush1.msra.mxu0 0.0
      %459 = vmatprep.subr.mxu0 0.0
      %460 = vmatpush1.msra.mxu0 0.0
      %461 = vmatprep.subr.mxu0 0.0
      %462 = vmatpush1.msra.mxu0 0.0
      %463 = vmatprep.subr.mxu0 0.0
      %464 = vmatpush1.msra.mxu0 0.0
      %465 = vmatprep.subr.mxu0 0.0
      %466 = vmatpush1.msra.mxu0 0.0
      %467 = vmatprep.subr.mxu0 0.0
      %468 = vmatpush1.msra.mxu0 0.0
      %469 = vmatprep.subr.mxu0 0.0
      %470 = vmatpush1.msra.mxu0 0.0
      %471 = vmatprep.subr.mxu0 0.0
      %472 = vmatpush1.msra.mxu0 0.0
      %473 = vmatprep.subr.mxu0 0.0
      %474 = vmatpush1.msra.mxu0 0.0
      %475 = vmatprep.subr.mxu0 0.0
      %476 = vmatpush1.msra.mxu0 0.0
      %477 = vmatprep.subr.mxu0 0.0
      %478 = vmatpush1.msra.mxu0 0.0
      %479 = vmatprep.subr.mxu0 0.0
      %480 = vmatpush1.msra.mxu0 0.0
      %481 = vmatprep.subr.mxu0 0.0
      %482 = vmatpush1.msra.mxu0 0.0
      %483 = vmatprep.subr.mxu0 0.0
      %484 = vmatpush1.msra.mxu0 0.0
      %485 = vmatprep.subr.mxu0 0.0
      %486 = vmatpush1.msra.mxu0 0.0
      %487 = vmatprep.subr.mxu0 0.0
      %488 = vmatpush1.msra.mxu0 0.0
      %489 = vmatprep.subr.mxu0 0.0
      %490 = vmatpush1.msra.mxu0 0.0
      %491 = vmatprep.subr.mxu0 0.0
      %492 = vmatpush1.msra.mxu0 0.0
      %493 = vmatprep.subr.mxu0 0.0
      %494 = vmatpush1.msra.mxu0 0.0
      %495 = vmatprep.subr.mxu0 0.0
      %496 = vmatpush1.msra.mxu0 0.0
      %497 = vmatprep.subr.mxu0 0.0
      %498 = vmatpush1.msra.mxu0 0.0
      %499 = vmatprep.subr.mxu0 0.0
      %500 = vmatpush1.msra.mxu0 0.0
      %501 = vmatprep.subr.mxu0 0.0
      %502 = vmatpush1.msra.mxu0 0.0
      %503 = vmatprep.subr.mxu0 0.0
      %504 = vmatpush1.msra.mxu0 0.0
      %505 = vmatprep.subr.mxu0 0.0
      %506 = vmatpush1.msra.mxu0 0.0
      %507 = vmatprep.subr.mxu0 0.0
      %508 = vmatpush1.msra.mxu0 0.0
      %509 = vmatprep.mubr.f32.mxu0 0.0
      %510 = vmatmul.mubr.f32.gmra.mrb[0].mxu0 %v443
      %v511 = vpop.f32.mrb[0].mxu0
      %v512 = vadd.f32 0.0, %v511
      %v513 = vpop.f32.mrb[0].mxu0
      %514 = vdwg.mxu0
      %v515 = vadd.f32 %v441, %v512
      %v516 = vxor.u32 %v515, 2147483648
      %v517 = vmul.f32 %v516, 1.442695
      %v518 = vpow.pop %v517
      %v519 = vadd.f32 %v518, 1.0
      %v520 = vrcp.pop %v519
      %v521 = vmul.f32 1.0, %v520
      %v522 = vtanh.pop %v515
      %v523 = vmul.f32 %v521, 0.0
      %525 = vrot.lane.b32.xlu0 %v522, 80
      %v526 = vpop.permute.xlu0 %525
      %v528 = vmul.f32 %v521, %v526
      %530 = vrot.lane.b32.xlu0 %v528, 16
      %v531 = vpop.permute.xlu0 %530
      %v533 = vadd.f32 %v523, %v531
      %v534 = vtanh.pop %v533
      %536 = vrot.lane.b32.xlu0 %v534, 16
      %v537 = vpop.permute.xlu0 %536
      %v539 = vmul.f32 %v521, %v537
      %541 = vrot.lane.b32.xlu0 %v539, 96
      %v542 = vpop.permute.xlu0 %541
      %s544 = scalar_lea.vmem [#allocation3], %s439
      %545 = vst.msk [vmem:[%s544] sm:$0xff] %vm297, %v542
      %s546 = scalar_select %p279, 1, 6
      %s547 = smul.u32 %s546, 8
      %s548 = scalar_lea.vmem [#allocation2], %s547
      %v549 = vld [vmem:[%s548] sm:$0xff]
      %v550 = vsel %vm297, %v542, 0
      %552 = vmatprep.subr.mxu0 0.0
      %553 = vmatpush1.msra.mxu0 %v436
      %554 = vmatprep.subr.mxu0 0.0
      %555 = vmatpush1.msra.mxu0 %v437
      %556 = vmatprep.subr.mxu0 0.0
      %557 = vmatpush1.msra.mxu0 0.0
      %558 = vmatprep.subr.mxu0 0.0
      %559 = vmatpush1.msra.mxu0 0.0
      %560 = vmatprep.subr.mxu0 0.0
      %561 = vmatpush1.msra.mxu0 0.0
      %562 = vmatprep.subr.mxu0 0.0
      %563 = vmatpush1.msra.mxu0 0.0
      %564 = vmatprep.subr.mxu0 0.0
      %565 = vmatpush1.msra.mxu0 0.0
      %566 = vmatprep.subr.mxu0 0.0
      %567 = vmatpush1.msra.mxu0 0.0
      %568 = vmatprep.subr.mxu0 0.0
      %569 = vmatpush1.msra.mxu0 0.0
      %570 = vmatprep.subr.mxu0 0.0
      %571 = vmatpush1.msra.mxu0 0.0
      %572 = vmatprep.subr.mxu0 0.0
      %573 = vmatpush1.msra.mxu0 0.0
      %574 = vmatprep.subr.mxu0 0.0
      %575 = vmatpush1.msra.mxu0 0.0
      %576 = vmatprep.subr.mxu0 0.0
      %577 = vmatpush1.msra.mxu0 0.0
      %578 = vmatprep.subr.mxu0 0.0
      %579 = vmatpush1.msra.mxu0 0.0
      %580 = vmatprep.subr.mxu0 0.0
      %581 = vmatpush1.msra.mxu0 0.0
      %582 = vmatprep.subr.mxu0 0.0
      %583 = vmatpush1.msra.mxu0 0.0
      %584 = vmatprep.subr.mxu0 0.0
      %585 = vmatpush1.msra.mxu0 0.0
      %586 = vmatprep.subr.mxu0 0.0
      %587 = vmatpush1.msra.mxu0 0.0
      %588 = vmatprep.subr.mxu0 0.0
      %589 = vmatpush1.msra.mxu0 0.0
      %590 = vmatprep.subr.mxu0 0.0
      %591 = vmatpush1.msra.mxu0 0.0
      %592 = vmatprep.subr.mxu0 0.0
      %593 = vmatpush1.msra.mxu0 0.0
      %594 = vmatprep.subr.mxu0 0.0
      %595 = vmatpush1.msra.mxu0 0.0
      %596 = vmatprep.subr.mxu0 0.0
      %597 = vmatpush1.msra.mxu0 0.0
      %598 = vmatprep.subr.mxu0 0.0
      %599 = vmatpush1.msra.mxu0 0.0
      %600 = vmatprep.subr.mxu0 0.0
      %601 = vmatpush1.msra.mxu0 0.0
      %602 = vmatprep.subr.mxu0 0.0
      %603 = vmatpush1.msra.mxu0 0.0
      %604 = vmatprep.subr.mxu0 0.0
      %605 = vmatpush1.msra.mxu0 0.0
      %606 = vmatprep.subr.mxu0 0.0
      %607 = vmatpush1.msra.mxu0 0.0
      %608 = vmatprep.subr.mxu0 0.0
      %609 = vmatpush1.msra.mxu0 0.0
      %610 = vmatprep.subr.mxu0 0.0
      %611 = vmatpush1.msra.mxu0 0.0
      %612 = vmatprep.subr.mxu0 0.0
      %613 = vmatpush1.msra.mxu0 0.0
      %614 = vmatprep.subr.mxu0 0.0
      %615 = vmatpush1.msra.mxu0 0.0
      %616 = vmatprep.mubr.f32.mxu0 0.0
      %617 = vmatmul.mubr.f32.gmra.mrb[0].mxu0 %v550
      %v618 = vpop.f32.mrb[0].mxu0
      %v619 = vadd.f32 0.0, %v618
      %v620 = vpop.f32.mrb[0].mxu0
      %621 = vdwg.mxu0
      %v622 = vadd.f32 %v549, %v619
      %v623 = vxor.u32 %v622, 2147483648
      %v624 = vmul.f32 %v623, 1.442695
      %v625 = vpow.pop %v624
      %v626 = vadd.f32 %v625, 1.0
      %v627 = vrcp.pop %v626
      %v628 = vmul.f32 1.0, %v627
      %v629 = vtanh.pop %v622
      %v630 = vmul.f32 %v628, %v533
      %632 = vrot.lane.b32.xlu0 %v629, 80
      %v633 = vpop.permute.xlu0 %632
      %v635 = vmul.f32 %v628, %v633
      %637 = vrot.lane.b32.xlu0 %v635, 16
      %v638 = vpop.permute.xlu0 %637
      %v640 = vadd.f32 %v630, %v638
      %v641 = vtanh.pop %v640
      %643 = vrot.lane.b32.xlu0 %v641, 16
      %v644 = vpop.permute.xlu0 %643
      %v646 = vmul.f32 %v628, %v644
      %648 = vrot.lane.b32.xlu0 %v646, 96
      %v649 = vpop.permute.xlu0 %648
      %s651 = scalar_lea.vmem [#allocation3], %s547
      %652 = vst.msk [vmem:[%s651] sm:$0xff] %vm297, %v649
      %s653 = scalar_select %p279, 2, 5
      %s654 = smul.u32 %s653, 8
      %s655 = scalar_lea.vmem [#allocation2], %s654
      %v656 = vld [vmem:[%s655] sm:$0xff]
      %v657 = vsel %vm297, %v649, 0
      %659 = vmatprep.subr.mxu0 0.0
      %660 = vmatpush1.msra.mxu0 %v436
      %661 = vmatprep.subr.mxu0 0.0
      %662 = vmatpush1.msra.mxu0 %v437
      %663 = vmatprep.subr.mxu0 0.0
      %664 = vmatpush1.msra.mxu0 0.0
      %665 = vmatprep.subr.mxu0 0.0
      %666 = vmatpush1.msra.mxu0 0.0
      %667 = vmatprep.subr.mxu0 0.0
      %668 = vmatpush1.msra.mxu0 0.0
      %669 = vmatprep.subr.mxu0 0.0
      %670 = vmatpush1.msra.mxu0 0.0
      %671 = vmatprep.subr.mxu0 0.0
      %672 = vmatpush1.msra.mxu0 0.0
      %673 = vmatprep.subr.mxu0 0.0
      %674 = vmatpush1.msra.mxu0 0.0
      %675 = vmatprep.subr.mxu0 0.0
      %676 = vmatpush1.msra.mxu0 0.0
      %677 = vmatprep.subr.mxu0 0.0
      %678 = vmatpush1.msra.mxu0 0.0
      %679 = vmatprep.subr.mxu0 0.0
      %680 = vmatpush1.msra.mxu0 0.0
      %681 = vmatprep.subr.mxu0 0.0
      %682 = vmatpush1.msra.mxu0 0.0
      %683 = vmatprep.subr.mxu0 0.0
      %684 = vmatpush1.msra.mxu0 0.0
      %685 = vmatprep.subr.mxu0 0.0
      %686 = vmatpush1.msra.mxu0 0.0
      %687 = vmatprep.subr.mxu0 0.0
      %688 = vmatpush1.msra.mxu0 0.0
      %689 = vmatprep.subr.mxu0 0.0
      %690 = vmatpush1.msra.mxu0 0.0
      %691 = vmatprep.subr.mxu0 0.0
      %692 = vmatpush1.msra.mxu0 0.0
      %693 = vmatprep.subr.mxu0 0.0
      %694 = vmatpush1.msra.mxu0 0.0
      %695 = vmatprep.subr.mxu0 0.0
      %696 = vmatpush1.msra.mxu0 0.0
      %697 = vmatprep.subr.mxu0 0.0
      %698 = vmatpush1.msra.mxu0 0.0
      %699 = vmatprep.subr.mxu0 0.0
      %700 = vmatpush1.msra.mxu0 0.0
      %701 = vmatprep.subr.mxu0 0.0
      %702 = vmatpush1.msra.mxu0 0.0
      %703 = vmatprep.subr.mxu0 0.0
      %704 = vmatpush1.msra.mxu0 0.0
      %705 = vmatprep.subr.mxu0 0.0
      %706 = vmatpush1.msra.mxu0 0.0
      %707 = vmatprep.subr.mxu0 0.0
      %708 = vmatpush1.msra.mxu0 0.0
      %709 = vmatprep.subr.mxu0 0.0
      %710 = vmatpush1.msra.mxu0 0.0
      %711 = vmatprep.subr.mxu0 0.0
      %712 = vmatpush1.msra.mxu0 0.0
      %713 = vmatprep.subr.mxu0 0.0
      %714 = vmatpush1.msra.mxu0 0.0
      %715 = vmatprep.subr.mxu0 0.0
      %716 = vmatpush1.msra.mxu0 0.0
      %717 = vmatprep.subr.mxu0 0.0
      %718 = vmatpush1.msra.mxu0 0.0
      %719 = vmatprep.subr.mxu0 0.0
      %720 = vmatpush1.msra.mxu0 0.0
      %721 = vmatprep.subr.mxu0 0.0
      %722 = vmatpush1.msra.mxu0 0.0
      %723 = vmatprep.mubr.f32.mxu0 0.0
      %724 = vmatmul.mubr.f32.gmra.mrb[0].mxu0 %v657
      %v725 = vpop.f32.mrb[0].mxu0
      %v726 = vadd.f32 0.0, %v725
      %v727 = vpop.f32.mrb[0].mxu0
      %728 = vdwg.mxu0
      %v729 = vadd.f32 %v656, %v726
      %v730 = vxor.u32 %v729, 2147483648
      %v731 = vmul.f32 %v730, 1.442695
      %v732 = vpow.pop %v731
      %v733 = vadd.f32 %v732, 1.0
      %v734 = vrcp.pop %v733
      %v735 = vmul.f32 1.0, %v734
      %v736 = vtanh.pop %v729
      %v737 = vmul.f32 %v735, %v640
      %739 = vrot.lane.b32.xlu0 %v736, 80
      %v740 = vpop.permute.xlu0 %739
      %v742 = vmul.f32 %v735, %v740
      %744 = vrot.lane.b32.xlu0 %v742, 16
      %v745 = vpop.permute.xlu0 %744
      %v747 = vadd.f32 %v737, %v745
      %v748 = vtanh.pop %v747
      %750 = vrot.lane.b32.xlu0 %v748, 16
      %v751 = vpop.permute.xlu0 %750
      %v753 = vmul.f32 %v735, %v751
      %755 = vrot.lane.b32.xlu0 %v753, 96
      %v756 = vpop.permute.xlu0 %755
      %s758 = scalar_lea.vmem [#allocation3], %s654
      %759 = vst.msk [vmem:[%s758] sm:$0xff] %vm297, %v756
      %s760 = scalar_select %p279, 3, 4
      %s761 = smul.u32 %s760, 8
      %s762 = scalar_lea.vmem [#allocation2], %s761
      %v763 = vld [vmem:[%s762] sm:$0xff]
      %v764 = vsel %vm297, %v756, 0
      %766 = vmatprep.subr.mxu0 0.0
      %767 = vmatpush1.msra.mxu0 %v436
      %768 = vmatprep.subr.mxu0 0.0
      %769 = vmatpush1.msra.mxu0 %v437
      %770 = vmatprep.subr.mxu0 0.0
      %771 = vmatpush1.msra.mxu0 0.0
      %772 = vmatprep.subr.mxu0 0.0
      %773 = vmatpush1.msra.mxu0 0.0
      %774 = vmatprep.subr.mxu0 0.0
      %775 = vmatpush1.msra.mxu0 0.0
      %776 = vmatprep.subr.mxu0 0.0
      %777 = vmatpush1.msra.mxu0 0.0
      %778 = vmatprep.subr.mxu0 0.0
      %779 = vmatpush1.msra.mxu0 0.0
      %780 = vmatprep.subr.mxu0 0.0
      %781 = vmatpush1.msra.mxu0 0.0
      %782 = vmatprep.subr.mxu0 0.0
      %783 = vmatpush1.msra.mxu0 0.0
      %784 = vmatprep.subr.mxu0 0.0
      %785 = vmatpush1.msra.mxu0 0.0
      %786 = vmatprep.subr.mxu0 0.0
      %787 = vmatpush1.msra.mxu0 0.0
      %788 = vmatprep.subr.mxu0 0.0
      %789 = vmatpush1.msra.mxu0 0.0
      %790 = vmatprep.subr.mxu0 0.0
      %791 = vmatpush1.msra.mxu0 0.0
      %792 = vmatprep.subr.mxu0 0.0
      %793 = vmatpush1.msra.mxu0 0.0
      %794 = vmatprep.subr.mxu0 0.0
      %795 = vmatpush1.msra.mxu0 0.0
      %796 = vmatprep.subr.mxu0 0.0
      %797 = vmatpush1.msra.mxu0 0.0
      %798 = vmatprep.subr.mxu0 0.0
      %799 = vmatpush1.msra.mxu0 0.0
      %800 = vmatprep.subr.mxu0 0.0
      %801 = vmatpush1.msra.mxu0 0.0
      %802 = vmatprep.subr.mxu0 0.0
      %803 = vmatpush1.msra.mxu0 0.0
      %804 = vmatprep.subr.mxu0 0.0
      %805 = vmatpush1.msra.mxu0 0.0
      %806 = vmatprep.subr.mxu0 0.0
      %807 = vmatpush1.msra.mxu0 0.0
      %808 = vmatprep.subr.mxu0 0.0
      %809 = vmatpush1.msra.mxu0 0.0
      %810 = vmatprep.subr.mxu0 0.0
      %811 = vmatpush1.msra.mxu0 0.0
      %812 = vmatprep.subr.mxu0 0.0
      %813 = vmatpush1.msra.mxu0 0.0
      %814 = vmatprep.subr.mxu0 0.0
      %815 = vmatpush1.msra.mxu0 0.0
      %816 = vmatprep.subr.mxu0 0.0
      %817 = vmatpush1.msra.mxu0 0.0
      %818 = vmatprep.subr.mxu0 0.0
      %819 = vmatpush1.msra.mxu0 0.0
      %820 = vmatprep.subr.mxu0 0.0
      %821 = vmatpush1.msra.mxu0 0.0
      %822 = vmatprep.subr.mxu0 0.0
      %823 = vmatpush1.msra.mxu0 0.0
      %824 = vmatprep.subr.mxu0 0.0
      %825 = vmatpush1.msra.mxu0 0.0
      %826 = vmatprep.subr.mxu0 0.0
      %827 = vmatpush1.msra.mxu0 0.0
      %828 = vmatprep.subr.mxu0 0.0
      %829 = vmatpush1.msra.mxu0 0.0
      %830 = vmatprep.mubr.f32.mxu0 0.0
      %831 = vmatmul.mubr.f32.gmra.mrb[0].mxu0 %v764
      %v832 = vpop.f32.mrb[0].mxu0
      %v833 = vadd.f32 0.0, %v832
      %v834 = vpop.f32.mrb[0].mxu0
      %835 = vdwg.mxu0
      %v836 = vadd.f32 %v763, %v833
      %v837 = vxor.u32 %v836, 2147483648
      %v838 = vmul.f32 %v837, 1.442695
      %v839 = vpow.pop %v838
      %v840 = vadd.f32 %v839, 1.0
      %v841 = vrcp.pop %v840
      %v842 = vmul.f32 1.0, %v841
      %v843 = vtanh.pop %v836
      %v844 = vmul.f32 %v842, %v747
      %846 = vrot.lane.b32.xlu0 %v843, 80
      %v847 = vpop.permute.xlu0 %846
      %v849 = vmul.f32 %v842, %v847
      %851 = vrot.lane.b32.xlu0 %v849, 16
      %v852 = vpop.permute.xlu0 %851
      %v854 = vadd.f32 %v844, %v852
      %v855 = vtanh.pop %v854
      %857 = vrot.lane.b32.xlu0 %v855, 16
      %v858 = vpop.permute.xlu0 %857
      %v860 = vmul.f32 %v842, %v858
      %862 = vrot.lane.b32.xlu0 %v860, 96
      %v863 = vpop.permute.xlu0 %862
      %s865 = scalar_lea.vmem [#allocation3], %s761
      %866 = vst.msk [vmem:[%s865] sm:$0xff] %vm297, %v863
      %s867 = scalar_select %p279, 4, 3
      %s868 = smul.u32 %s867, 8
      %s869 = scalar_lea.vmem [#allocation2], %s868
      %v870 = vld [vmem:[%s869] sm:$0xff]
      %v871 = vsel %vm297, %v863, 0
      %873 = vmatprep.subr.mxu0 0.0
      %874 = vmatpush1.msra.mxu0 %v436
      %875 = vmatprep.subr.mxu0 0.0
      %876 = vmatpush1.msra.mxu0 %v437
      %877 = vmatprep.subr.mxu0 0.0
      %878 = vmatpush1.msra.mxu0 0.0
      %879 = vmatprep.subr.mxu0 0.0
      %880 = vmatpush1.msra.mxu0 0.0
      %881 = vmatprep.subr.mxu0 0.0
      %882 = vmatpush1.msra.mxu0 0.0
      %883 = vmatprep.subr.mxu0 0.0
      %884 = vmatpush1.msra.mxu0 0.0
      %885 = vmatprep.subr.mxu0 0.0
      %886 = vmatpush1.msra.mxu0 0.0
      %887 = vmatprep.subr.mxu0 0.0
      %888 = vmatpush1.msra.mxu0 0.0
      %889 = vmatprep.subr.mxu0 0.0
      %890 = vmatpush1.msra.mxu0 0.0
      %891 = vmatprep.subr.mxu0 0.0
      %892 = vmatpush1.msra.mxu0 0.0
      %893 = vmatprep.subr.mxu0 0.0
      %894 = vmatpush1.msra.mxu0 0.0
      %895 = vmatprep.subr.mxu0 0.0
      %896 = vmatpush1.msra.mxu0 0.0
      %897 = vmatprep.subr.mxu0 0.0
      %898 = vmatpush1.msra.mxu0 0.0
      %899 = vmatprep.subr.mxu0 0.0
      %900 = vmatpush1.msra.mxu0 0.0
      %901 = vmatprep.subr.mxu0 0.0
      %902 = vmatpush1.msra.mxu0 0.0
      %903 = vmatprep.subr.mxu0 0.0
      %904 = vmatpush1.msra.mxu0 0.0
      %905 = vmatprep.subr.mxu0 0.0
      %906 = vmatpush1.msra.mxu0 0.0
      %907 = vmatprep.subr.mxu0 0.0
      %908 = vmatpush1.msra.mxu0 0.0
      %909 = vmatprep.subr.mxu0 0.0
      %910 = vmatpush1.msra.mxu0 0.0
      %911 = vmatprep.subr.mxu0 0.0
      %912 = vmatpush1.msra.mxu0 0.0
      %913 = vmatprep.subr.mxu0 0.0
      %914 = vmatpush1.msra.mxu0 0.0
      %915 = vmatprep.subr.mxu0 0.0
      %916 = vmatpush1.msra.mxu0 0.0
      %917 = vmatprep.subr.mxu0 0.0
      %918 = vmatpush1.msra.mxu0 0.0
      %919 = vmatprep.subr.mxu0 0.0
      %920 = vmatpush1.msra.mxu0 0.0
      %921 = vmatprep.subr.mxu0 0.0
      %922 = vmatpush1.msra.mxu0 0.0
      %923 = vmatprep.subr.mxu0 0.0
      %924 = vmatpush1.msra.mxu0 0.0
      %925 = vmatprep.subr.mxu0 0.0
      %926 = vmatpush1.msra.mxu0 0.0
      %927 = vmatprep.subr.mxu0 0.0
      %928 = vmatpush1.msra.mxu0 0.0
      %929 = vmatprep.subr.mxu0 0.0
      %930 = vmatpush1.msra.mxu0 0.0
      %931 = vmatprep.subr.mxu0 0.0
      %932 = vmatpush1.msra.mxu0 0.0
      %933 = vmatprep.subr.mxu0 0.0
      %934 = vmatpush1.msra.mxu0 0.0
      %935 = vmatprep.subr.mxu0 0.0
      %936 = vmatpush1.msra.mxu0 0.0
      %937 = vmatprep.mubr.f32.mxu0 0.0
      %938 = vmatmul.mubr.f32.gmra.mrb[0].mxu0 %v871
      %v939 = vpop.f32.mrb[0].mxu0
      %v940 = vadd.f32 0.0, %v939
      %v941 = vpop.f32.mrb[0].mxu0
      %942 = vdwg.mxu0
      %v943 = vadd.f32 %v870, %v940
      %v944 = vxor.u32 %v943, 2147483648
      %v945 = vmul.f32 %v944, 1.442695
      %v946 = vpow.pop %v945
      %v947 = vadd.f32 %v946, 1.0
      %v948 = vrcp.pop %v947
      %v949 = vmul.f32 1.0, %v948
      %v950 = vtanh.pop %v943
      %v951 = vmul.f32 %v949, %v854
      %953 = vrot.lane.b32.xlu0 %v950, 80
      %v954 = vpop.permute.xlu0 %953
      %v956 = vmul.f32 %v949, %v954
      %958 = vrot.lane.b32.xlu0 %v956, 16
      %v959 = vpop.permute.xlu0 %958
      %v961 = vadd.f32 %v951, %v959
      %v962 = vtanh.pop %v961
      %964 = vrot.lane.b32.xlu0 %v962, 16
      %v965 = vpop.permute.xlu0 %964
      %v967 = vmul.f32 %v949, %v965
      %969 = vrot.lane.b32.xlu0 %v967, 96
      %v970 = vpop.permute.xlu0 %969
      %s972 = scalar_lea.vmem [#allocation3], %s868
      %973 = vst.msk [vmem:[%s972] sm:$0xff] %vm297, %v970
      %s974 = scalar_select %p279, 5, 2
      %s975 = smul.u32 %s974, 8
      %s976 = scalar_lea.vmem [#allocation2], %s975
      %v977 = vld [vmem:[%s976] sm:$0xff]
      %v978 = vsel %vm297, %v970, 0
      %980 = vmatprep.subr.mxu0 0.0
      %981 = vmatpush1.msra.mxu0 %v436
      %982 = vmatprep.subr.mxu0 0.0
      %983 = vmatpush1.msra.mxu0 %v437
      %984 = vmatprep.subr.mxu0 0.0
      %985 = vmatpush1.msra.mxu0 0.0
      %986 = vmatprep.subr.mxu0 0.0
      %987 = vmatpush1.msra.mxu0 0.0
      %988 = vmatprep.subr.mxu0 0.0
      %989 = vmatpush1.msra.mxu0 0.0
      %990 = vmatprep.subr.mxu0 0.0
      %991 = vmatpush1.msra.mxu0 0.0
      %992 = vmatprep.subr.mxu0 0.0
      %993 = vmatpush1.msra.mxu0 0.0
      %994 = vmatprep.subr.mxu0 0.0
      %995 = vmatpush1.msra.mxu0 0.0
      %996 = vmatprep.subr.mxu0 0.0
      %997 = vmatpush1.msra.mxu0 0.0
      %998 = vmatprep.subr.mxu0 0.0
      %999 = vmatpush1.msra.mxu0 0.0
      %1000 = vmatprep.subr.mxu0 0.0
      %1001 = vmatpush1.msra.mxu0 0.0
      %1002 = vmatprep.subr.mxu0 0.0
      %1003 = vmatpush1.msra.mxu0 0.0
      %1004 = vmatprep.subr.mxu0 0.0
      %1005 = vmatpush1.msra.mxu0 0.0
      %1006 = vmatprep.subr.mxu0 0.0
      %1007 = vmatpush1.msra.mxu0 0.0
      %1008 = vmatprep.subr.mxu0 0.0
      %1009 = vmatpush1.msra.mxu0 0.0
      %1010 = vmatprep.subr.mxu0 0.0
      %1011 = vmatpush1.msra.mxu0 0.0
      %1012 = vmatprep.subr.mxu0 0.0
      %1013 = vmatpush1.msra.mxu0 0.0
      %1014 = vmatprep.subr.mxu0 0.0
      %1015 = vmatpush1.msra.mxu0 0.0
      %1016 = vmatprep.subr.mxu0 0.0
      %1017 = vmatpush1.msra.mxu0 0.0
      %1018 = vmatprep.subr.mxu0 0.0
      %1019 = vmatpush1.msra.mxu0 0.0
      %1020 = vmatprep.subr.mxu0 0.0
      %1021 = vmatpush1.msra.mxu0 0.0
      %1022 = vmatprep.subr.mxu0 0.0
      %1023 = vmatpush1.msra.mxu0 0.0
      %1024 = vmatprep.subr.mxu0 0.0
      %1025 = vmatpush1.msra.mxu0 0.0
      %1026 = vmatprep.subr.mxu0 0.0
      %1027 = vmatpush1.msra.mxu0 0.0
      %1028 = vmatprep.subr.mxu0 0.0
      %1029 = vmatpush1.msra.mxu0 0.0
      %1030 = vmatprep.subr.mxu0 0.0
      %1031 = vmatpush1.msra.mxu0 0.0
      %1032 = vmatprep.subr.mxu0 0.0
      %1033 = vmatpush1.msra.mxu0 0.0
      %1034 = vmatprep.subr.mxu0 0.0
      %1035 = vmatpush1.msra.mxu0 0.0
      %1036 = vmatprep.subr.mxu0 0.0
      %1037 = vmatpush1.msra.mxu0 0.0
      %1038 = vmatprep.subr.mxu0 0.0
      %1039 = vmatpush1.msra.mxu0 0.0
      %1040 = vmatprep.subr.mxu0 0.0
      %1041 = vmatpush1.msra.mxu0 0.0
      %1042 = vmatprep.subr.mxu0 0.0
      %1043 = vmatpush1.msra.mxu0 0.0
      %1044 = vmatprep.mubr.f32.mxu0 0.0
      %1045 = vmatmul.mubr.f32.gmra.mrb[0].mxu0 %v978
      %v1046 = vpop.f32.mrb[0].mxu0
      %v1047 = vadd.f32 0.0, %v1046
      %v1048 = vpop.f32.mrb[0].mxu0
      %1049 = vdwg.mxu0
      %v1050 = vadd.f32 %v977, %v1047
      %v1051 = vxor.u32 %v1050, 2147483648
      %v1052 = vmul.f32 %v1051, 1.442695
      %v1053 = vpow.pop %v1052
      %v1054 = vadd.f32 %v1053, 1.0
      %v1055 = vrcp.pop %v1054
      %v1056 = vmul.f32 1.0, %v1055
      %v1057 = vtanh.pop %v1050
      %v1058 = vmul.f32 %v1056, %v961
      %1060 = vrot.lane.b32.xlu0 %v1057, 80
      %v1061 = vpop.permute.xlu0 %1060
      %v1063 = vmul.f32 %v1056, %v1061
      %1065 = vrot.lane.b32.xlu0 %v1063, 16
      %v1066 = vpop.permute.xlu0 %1065
      %v1068 = vadd.f32 %v1058, %v1066
      %v1069 = vtanh.pop %v1068
      %1071 = vrot.lane.b32.xlu0 %v1069, 16
      %v1072 = vpop.permute.xlu0 %1071
      %v1074 = vmul.f32 %v1056, %v1072
      %1076 = vrot.lane.b32.xlu0 %v1074, 96
      %v1077 = vpop.permute.xlu0 %1076
      %s1079 = scalar_lea.vmem [#allocation3], %s975
      %1080 = vst.msk [vmem:[%s1079] sm:$0xff] %vm297, %v1077
      %s1081 = scalar_select %p279, 6, 1
      %s1082 = smul.u32 %s1081, 8
      %s1083 = scalar_lea.vmem [#allocation2], %s1082
      %v1084 = vld [vmem:[%s1083] sm:$0xff]
      %v1085 = vsel %vm297, %v1077, 0
      %1087 = vmatprep.subr.mxu0 0.0
      %1088 = vmatpush1.msra.mxu0 %v436
      %1089 = vmatprep.subr.mxu0 0.0
      %1090 = vmatpush1.msra.mxu0 %v437
      %1091 = vmatprep.subr.mxu0 0.0
      %1092 = vmatpush1.msra.mxu0 0.0
      %1093 = vmatprep.subr.mxu0 0.0
      %1094 = vmatpush1.msra.mxu0 0.0
      %1095 = vmatprep.subr.mxu0 0.0
      %1096 = vmatpush1.msra.mxu0 0.0
      %1097 = vmatprep.subr.mxu0 0.0
      %1098 = vmatpush1.msra.mxu0 0.0
      %1099 = vmatprep.subr.mxu0 0.0
      %1100 = vmatpush1.msra.mxu0 0.0
      %1101 = vmatprep.subr.mxu0 0.0
      %1102 = vmatpush1.msra.mxu0 0.0
      %1103 = vmatprep.subr.mxu0 0.0
      %1104 = vmatpush1.msra.mxu0 0.0
      %1105 = vmatprep.subr.mxu0 0.0
      %1106 = vmatpush1.msra.mxu0 0.0
      %1107 = vmatprep.subr.mxu0 0.0
      %1108 = vmatpush1.msra.mxu0 0.0
      %1109 = vmatprep.subr.mxu0 0.0
      %1110 = vmatpush1.msra.mxu0 0.0
      %1111 = vmatprep.subr.mxu0 0.0
      %1112 = vmatpush1.msra.mxu0 0.0
      %1113 = vmatprep.subr.mxu0 0.0
      %1114 = vmatpush1.msra.mxu0 0.0
      %1115 = vmatprep.subr.mxu0 0.0
      %1116 = vmatpush1.msra.mxu0 0.0
      %1117 = vmatprep.subr.mxu0 0.0
      %1118 = vmatpush1.msra.mxu0 0.0
      %1119 = vmatprep.subr.mxu0 0.0
      %1120 = vmatpush1.msra.mxu0 0.0
      %1121 = vmatprep.subr.mxu0 0.0
      %1122 = vmatpush1.msra.mxu0 0.0
      %1123 = vmatprep.subr.mxu0 0.0
      %1124 = vmatpush1.msra.mxu0 0.0
      %1125 = vmatprep.subr.mxu0 0.0
      %1126 = vmatpush1.msra.mxu0 0.0
      %1127 = vmatprep.subr.mxu0 0.0
      %1128 = vmatpush1.msra.mxu0 0.0
      %1129 = vmatprep.subr.mxu0 0.0
      %1130 = vmatpush1.msra.mxu0 0.0
      %1131 = vmatprep.subr.mxu0 0.0
      %1132 = vmatpush1.msra.mxu0 0.0
      %1133 = vmatprep.subr.mxu0 0.0
      %1134 = vmatpush1.msra.mxu0 0.0
      %1135 = vmatprep.subr.mxu0 0.0
      %1136 = vmatpush1.msra.mxu0 0.0
      %1137 = vmatprep.subr.mxu0 0.0
      %1138 = vmatpush1.msra.mxu0 0.0
      %1139 = vmatprep.subr.mxu0 0.0
      %1140 = vmatpush1.msra.mxu0 0.0
      %1141 = vmatprep.subr.mxu0 0.0
      %1142 = vmatpush1.msra.mxu0 0.0
      %1143 = vmatprep.subr.mxu0 0.0
      %1144 = vmatpush1.msra.mxu0 0.0
      %1145 = vmatprep.subr.mxu0 0.0
      %1146 = vmatpush1.msra.mxu0 0.0
      %1147 = vmatprep.subr.mxu0 0.0
      %1148 = vmatpush1.msra.mxu0 0.0
      %1149 = vmatprep.subr.mxu0 0.0
      %1150 = vmatpush1.msra.mxu0 0.0
      %1151 = vmatprep.mubr.f32.mxu0 0.0
      %1152 = vmatmul.mubr.f32.gmra.mrb[0].mxu0 %v1085
      %v1153 = vpop.f32.mrb[0].mxu0
      %v1154 = vadd.f32 0.0, %v1153
      %v1155 = vpop.f32.mrb[0].mxu0
      %1156 = vdwg.mxu0
      %v1157 = vadd.f32 %v1084, %v1154
      %v1158 = vxor.u32 %v1157, 2147483648
      %v1159 = vmul.f32 %v1158, 1.442695
      %v1160 = vpow.pop %v1159
      %v1161 = vadd.f32 %v1160, 1.0
      %v1162 = vrcp.pop %v1161
      %v1163 = vmul.f32 1.0, %v1162
      %v1164 = vtanh.pop %v1157
      %v1165 = vmul.f32 %v1163, %v1068
      %1167 = vrot.lane.b32.xlu0 %v1164, 80
      %v1168 = vpop.permute.xlu0 %1167
      %v1170 = vmul.f32 %v1163, %v1168
      %1172 = vrot.lane.b32.xlu0 %v1170, 16
      %v1173 = vpop.permute.xlu0 %1172
      %v1175 = vadd.f32 %v1165, %v1173
      %v1176 = vtanh.pop %v1175
      %1178 = vrot.lane.b32.xlu0 %v1176, 16
      %v1179 = vpop.permute.xlu0 %1178
      %v1181 = vmul.f32 %v1163, %v1179
      %1183 = vrot.lane.b32.xlu0 %v1181, 96
      %v1184 = vpop.permute.xlu0 %1183
      %s1186 = scalar_lea.vmem [#allocation3], %s1082
      %1187 = vst.msk [vmem:[%s1186] sm:$0xff] %vm297, %v1184
      %s1188 = scalar_select %p279, 7, 0
      %s1189 = smul.u32 %s1188, 8
      %s1190 = scalar_lea.vmem [#allocation2], %s1189
      %v1191 = vld [vmem:[%s1190] sm:$0xff]
      %v1192 = vsel %vm297, %v1184, 0
      %1194 = vmatprep.subr.mxu0 0.0
      %1195 = vmatpush1.msra.mxu0 %v436
      %1196 = vmatprep.subr.mxu0 0.0
      %1197 = vmatpush1.msra.mxu0 %v437
      %1198 = vmatprep.subr.mxu0 0.0
      %1199 = vmatpush1.msra.mxu0 0.0
      %1200 = vmatprep.subr.mxu0 0.0
      %1201 = vmatpush1.msra.mxu0 0.0
      %1202 = vmatprep.subr.mxu0 0.0
      %1203 = vmatpush1.msra.mxu0 0.0
      %1204 = vmatprep.subr.mxu0 0.0
      %1205 = vmatpush1.msra.mxu0 0.0
      %1206 = vmatprep.subr.mxu0 0.0
      %1207 = vmatpush1.msra.mxu0 0.0
      %1208 = vmatprep.subr.mxu0 0.0
      %1209 = vmatpush1.msra.mxu0 0.0
      %1210 = vmatprep.subr.mxu0 0.0
      %1211 = vmatpush1.msra.mxu0 0.0
      %1212 = vmatprep.subr.mxu0 0.0
      %1213 = vmatpush1.msra.mxu0 0.0
      %1214 = vmatprep.subr.mxu0 0.0
      %1215 = vmatpush1.msra.mxu0 0.0
      %1216 = vmatprep.subr.mxu0 0.0
      %1217 = vmatpush1.msra.mxu0 0.0
      %1218 = vmatprep.subr.mxu0 0.0
      %1219 = vmatpush1.msra.mxu0 0.0
      %1220 = vmatprep.subr.mxu0 0.0
      %1221 = vmatpush1.msra.mxu0 0.0
      %1222 = vmatprep.subr.mxu0 0.0
      %1223 = vmatpush1.msra.mxu0 0.0
      %1224 = vmatprep.subr.mxu0 0.0
      %1225 = vmatpush1.msra.mxu0 0.0
      %1226 = vmatprep.subr.mxu0 0.0
      %1227 = vmatpush1.msra.mxu0 0.0
      %1228 = vmatprep.subr.mxu0 0.0
      %1229 = vmatpush1.msra.mxu0 0.0
      %1230 = vmatprep.subr.mxu0 0.0
      %1231 = vmatpush1.msra.mxu0 0.0
      %1232 = vmatprep.subr.mxu0 0.0
      %1233 = vmatpush1.msra.mxu0 0.0
      %1234 = vmatprep.subr.mxu0 0.0
      %1235 = vmatpush1.msra.mxu0 0.0
      %1236 = vmatprep.subr.mxu0 0.0
      %1237 = vmatpush1.msra.mxu0 0.0
      %1238 = vmatprep.subr.mxu0 0.0
      %1239 = vmatpush1.msra.mxu0 0.0
      %1240 = vmatprep.subr.mxu0 0.0
      %1241 = vmatpush1.msra.mxu0 0.0
      %1242 = vmatprep.subr.mxu0 0.0
      %1243 = vmatpush1.msra.mxu0 0.0
      %1244 = vmatprep.subr.mxu0 0.0
      %1245 = vmatpush1.msra.mxu0 0.0
      %1246 = vmatprep.subr.mxu0 0.0
      %1247 = vmatpush1.msra.mxu0 0.0
      %1248 = vmatprep.subr.mxu0 0.0
      %1249 = vmatpush1.msra.mxu0 0.0
      %1250 = vmatprep.subr.mxu0 0.0
      %1251 = vmatpush1.msra.mxu0 0.0
      %1252 = vmatprep.subr.mxu0 0.0
      %1253 = vmatpush1.msra.mxu0 0.0
      %1254 = vmatprep.subr.mxu0 0.0
      %1255 = vmatpush1.msra.mxu0 0.0
      %1256 = vmatprep.subr.mxu0 0.0
      %1257 = vmatpush1.msra.mxu0 0.0
      %1258 = vmatprep.mubr.f32.mxu0 0.0
      %1259 = vmatmul.mubr.f32.gmra.mrb[0].mxu0 %v1192
      %v1260 = vpop.f32.mrb[0].mxu0
      %v1261 = vadd.f32 0.0, %v1260
      %v1262 = vpop.f32.mrb[0].mxu0
      %1263 = vdwg.mxu0
      %v1264 = vadd.f32 %v1191, %v1261
      %v1265 = vxor.u32 %v1264, 2147483648
      %v1266 = vmul.f32 %v1265, 1.442695
      %v1267 = vpow.pop %v1266
      %v1268 = vadd.f32 %v1267, 1.0
      %v1269 = vrcp.pop %v1268
      %v1270 = vmul.f32 1.0, %v1269
      %v1271 = vtanh.pop %v1264
      %v1272 = vmul.f32 %v1270, %v1175
      %1274 = vrot.lane.b32.xlu0 %v1271, 80
      %v1275 = vpop.permute.xlu0 %1274
      %v1277 = vmul.f32 %v1270, %v1275
      %1279 = vrot.lane.b32.xlu0 %v1277, 16
      %v1280 = vpop.permute.xlu0 %1279
      %v1282 = vadd.f32 %v1272, %v1280
      %v1283 = vtanh.pop %v1282
      %1285 = vrot.lane.b32.xlu0 %v1283, 16
      %v1286 = vpop.permute.xlu0 %1285
      %v1288 = vmul.f32 %v1270, %v1286
      %1290 = vrot.lane.b32.xlu0 %v1288, 96
      %v1291 = vpop.permute.xlu0 %1290
      %s1293 = scalar_lea.vmem [#allocation3], %s1189
      %1294 = vst.msk [vmem:[%s1293] sm:$0xff] %vm297, %v1291
      %v1295 = vld [vmem:[#allocation3] sm:$0xff]
      %v1296 = vld [vmem:[#allocation3 + $0x8] sm:$0xff]
      %v1297 = vld [vmem:[#allocation3 + $0x10] sm:$0xff]
      %v1298 = vld [vmem:[#allocation3 + $0x18] sm:$0xff]
      %v1299 = vld [vmem:[#allocation3 + $0x20] sm:$0xff]
      %v1300 = vld [vmem:[#allocation3 + $0x28] sm:$0xff]
      %v1301 = vld [vmem:[#allocation3 + $0x30] sm:$0xff]
      %v1302 = vld [vmem:[#allocation3 + $0x38] sm:$0xff]
      %v1303 = vld [vmem:[%s273] sm:$0xff]
      %v1304 = vld [vmem:[%s273 + $0x8] sm:$0xff]
      %v1306 = vsel %vm297, %v1295, 0
      %v1309 = vsel %vm297, %v1296, 0
      %v1312 = vsel %vm297, %v1297, 0
      %v1315 = vsel %vm297, %v1298, 0
      %v1318 = vsel %vm297, %v1299, 0
      %v1321 = vsel %vm297, %v1300, 0
      %v1324 = vsel %vm297, %v1301, 0
      %v1327 = vsel %vm297, %v1302, 0
      %1329 = vmatprep.subr.mxu0 0.0
      %1330 = vmatpush1.msra.mxu0 %v1303
      %1331 = vmatprep.subr.mxu0 0.0
      %1332 = vmatpush1.msra.mxu0 %v1304
      %1333 = vmatprep.subr.mxu0 0.0
      %1334 = vmatpush1.msra.mxu0 0.0
      %1335 = vmatprep.subr.mxu0 0.0
      %1336 = vmatpush1.msra.mxu0 0.0
      %1337 = vmatprep.subr.mxu0 0.0
      %1338 = vmatpush1.msra.mxu0 0.0
      %1339 = vmatprep.subr.mxu0 0.0
      %1340 = vmatpush1.msra.mxu0 0.0
      %1341 = vmatprep.subr.mxu0 0.0
      %1342 = vmatpush1.msra.mxu0 0.0
      %1343 = vmatprep.subr.mxu0 0.0
      %1344 = vmatpush1.msra.mxu0 0.0
      %1345 = vmatprep.subr.mxu0 0.0
      %1346 = vmatpush1.msra.mxu0 0.0
      %1347 = vmatprep.subr.mxu0 0.0
      %1348 = vmatpush1.msra.mxu0 0.0
      %1349 = vmatprep.subr.mxu0 0.0
      %1350 = vmatpush1.msra.mxu0 0.0
      %1351 = vmatprep.subr.mxu0 0.0
      %1352 = vmatpush1.msra.mxu0 0.0
      %1353 = vmatprep.subr.mxu0 0.0
      %1354 = vmatpush1.msra.mxu0 0.0
      %1355 = vmatprep.subr.mxu0 0.0
      %1356 = vmatpush1.msra.mxu0 0.0
      %1357 = vmatprep.subr.mxu0 0.0
      %1358 = vmatpush1.msra.mxu0 0.0
      %1359 = vmatprep.subr.mxu0 0.0
      %1360 = vmatpush1.msra.mxu0 0.0
      %1361 = vmatprep.subr.mxu0 0.0
      %1362 = vmatpush1.msra.mxu0 0.0
      %1363 = vmatprep.subr.mxu0 0.0
      %1364 = vmatpush1.msra.mxu0 0.0
      %1365 = vmatprep.subr.mxu0 0.0
      %1366 = vmatpush1.msra.mxu0 0.0
      %1367 = vmatprep.subr.mxu0 0.0
      %1368 = vmatpush1.msra.mxu0 0.0
      %1369 = vmatprep.subr.mxu0 0.0
      %1370 = vmatpush1.msra.mxu0 0.0
      %1371 = vmatprep.subr.mxu0 0.0
      %1372 = vmatpush1.msra.mxu0 0.0
      %1373 = vmatprep.subr.mxu0 0.0
      %1374 = vmatpush1.msra.mxu0 0.0
      %1375 = vmatprep.subr.mxu0 0.0
      %1376 = vmatpush1.msra.mxu0 0.0
      %1377 = vmatprep.subr.mxu0 0.0
      %1378 = vmatpush1.msra.mxu0 0.0
      %1379 = vmatprep.subr.mxu0 0.0
      %1380 = vmatpush1.msra.mxu0 0.0
      %1381 = vmatprep.subr.mxu0 0.0
      %1382 = vmatpush1.msra.mxu0 0.0
      %1383 = vmatprep.subr.mxu0 0.0
      %1384 = vmatpush1.msra.mxu0 0.0
      %1385 = vmatprep.subr.mxu0 0.0
      %1386 = vmatpush1.msra.mxu0 0.0
      %1387 = vmatprep.subr.mxu0 0.0
      %1388 = vmatpush1.msra.mxu0 0.0
      %1389 = vmatprep.subr.mxu0 0.0
      %1390 = vmatpush1.msra.mxu0 0.0
      %1391 = vmatprep.subr.mxu0 0.0
      %1392 = vmatpush1.msra.mxu0 0.0
      %1393 = vmatprep.mubr.f32.mxu0 0.0
      %1394 = vmatmul.mubr.f32.gmra.mrb[0].mxu0 %v1306
      %v1395 = vpop.f32.mrb[0].mxu0
      %v1396 = vadd.f32 0.0, %v1395
      %v1397 = vpop.f32.mrb[0].mxu0
      %1398 = vmatprep.mubr.f32.mxu0 0.0
      %1399 = vmatmul.mubr.f32.gmra.mrb[0].mxu0 %v1309
      %v1400 = vpop.f32.mrb[0].mxu0
      %v1401 = vadd.f32 0.0, %v1400
      %v1402 = vpop.f32.mrb[0].mxu0
      %1403 = vmatprep.mubr.f32.mxu0 0.0
      %1404 = vmatmul.mubr.f32.gmra.mrb[0].mxu0 %v1312
      %v1405 = vpop.f32.mrb[0].mxu0
      %v1406 = vadd.f32 0.0, %v1405
      %v1407 = vpop.f32.mrb[0].mxu0
      %1408 = vmatprep.mubr.f32.mxu0 0.0
      %1409 = vmatmul.mubr.f32.gmra.mrb[0].mxu0 %v1315
      %v1410 = vpop.f32.mrb[0].mxu0
      %v1411 = vadd.f32 0.0, %v1410
      %v1412 = vpop.f32.mrb[0].mxu0
      %1413 = vmatprep.mubr.f32.mxu0 0.0
      %1414 = vmatmul.mubr.f32.gmra.mrb[0].mxu0 %v1318
      %v1415 = vpop.f32.mrb[0].mxu0
      %v1416 = vadd.f32 0.0, %v1415
      %v1417 = vpop.f32.mrb[0].mxu0
      %1418 = vmatprep.mubr.f32.mxu0 0.0
      %1419 = vmatmul.mubr.f32.gmra.mrb[0].mxu0 %v1321
      %v1420 = vpop.f32.mrb[0].mxu0
      %v1421 = vadd.f32 0.0, %v1420
      %v1422 = vpop.f32.mrb[0].mxu0
      %1423 = vmatprep.mubr.f32.mxu0 0.0
      %1424 = vmatmul.mubr.f32.gmra.mrb[0].mxu0 %v1324
      %v1425 = vpop.f32.mrb[0].mxu0
      %v1426 = vadd.f32 0.0, %v1425
      %v1427 = vpop.f32.mrb[0].mxu0
      %1428 = vmatprep.mubr.f32.mxu0 0.0
      %1429 = vmatmul.mubr.f32.gmra.mrb[0].mxu0 %v1327
      %v1430 = vpop.f32.mrb[0].mxu0
      %v1431 = vadd.f32 0.0, %v1430
      %v1432 = vpop.f32.mrb[0].mxu0
      %1433 = vdwg.mxu0
      %1434 = vst [vmem:[%s278] sm:$0xff] %v1396
      %1435 = vst [vmem:[%s278 + $0x8] sm:$0xff] %v1401
      %1436 = vst [vmem:[%s278 + $0x10] sm:$0xff] %v1406
      %1437 = vst [vmem:[%s278 + $0x18] sm:$0xff] %v1411
      %1438 = vst [vmem:[%s278 + $0x20] sm:$0xff] %v1416
      %1439 = vst [vmem:[%s278 + $0x28] sm:$0xff] %v1421
      %1440 = vst [vmem:[%s278 + $0x30] sm:$0xff] %v1426
      %1441 = vst [vmem:[%s278 + $0x38] sm:$0xff] %v1431
      %p1442 = scmp.lt.s32.totalorder %s16, 1
      %s1443 = scalar_select %p1442, %s16, 1
      %s1444 = smul.addr %s1443, 8
      %s1445 = smul.addr %s1444, 8
      %s1446 = scalar_lea.vmem %s5, %s1445
      // Predicated region
      $region41: #{bilstm_crf_forward.1} parent=39 // pred_check
        %p1447 = pneg %p159
      $region42: #{bilstm_crf_forward.1} parent=39 // pred_check_branch
        %1449 = sbr.rel (%p1447) target = $region44
      $region43: #{bilstm_crf_forward.1} parent=39 // pred_region
        _
      $region44: #{bilstm_crf_forward.1} parent=39 // pred_fallthru
        _
    $region40: #{bilstm_crf_forward.1} parent=5 // pred_fallthru
      _
    %p1450 = scmp.le.s32.totalorder 2, %s11
    // Predicated region
    $region45: #{bilstm_crf_forward.1} parent=5 // pred_check
      %p1451 = pneg %p1450
    $region46: #{bilstm_crf_forward.1} parent=5 // pred_check_branch
      %1453 = sbr.rel (%p1451) target = $region48
    $region47: #{bilstm_crf_forward.1} parent=5 // pred_region
      %s1454 = ssub.s32 %s11, 2
      // Predicated region
      $region49: #{bilstm_crf_forward.1} parent=47 // pred_check
        %p1455 = pneg %p165
      $region50: #{bilstm_crf_forward.1} parent=47 // pred_check_branch
        %1457 = sbr.rel (%p1455) target = $region52
      $region51: #{bilstm_crf_forward.1} parent=47 // pred_region
        %p1458 = scmp.lt.s32.totalorder %s17, 1
        %s1459 = scalar_select %p1458, %s17, 1
        %s1460 = smul.addr %s1459, 8
        %s1461 = smul.addr %s1460, 8
        %s1462 = scalar_lea.vmem %s5, %s1461
      $region52: #{bilstm_crf_forward.1} parent=47 // pred_fallthru
        _
    $region48: #{bilstm_crf_forward.1} parent=5 // pred_fallthru
      _
  $region6: #{bilstm_crf_forward.1} parent=0 // loop_footer
    %s15 = sadd.s32 1, %s11
  $region7: #{bilstm_crf_forward.1} parent=0 // loop_footer_branch
    %10 = sbr.rel target = $region3
  $region8: #{bilstm_crf_forward.1} parent=0 // loop_exit
    _

</llo_original>
